<compile_context>
chip_gen: v7x
topology: tpu7x:2x2x1
jax: 0.10.0
libtpu: 0.0.40
codegen_flags: <defaults>
</compile_context>

<pallas_src>
import jax
import jax.numpy as jnp
from jax.experimental import pallas as pl
from jax.experimental.pallas import tpu as pltpu


def _qnet_kernel(x_ref, w1_ref, b1_ref, w2_ref, b2_ref,
                 w3_ref, b3_ref, w4_ref, b4_ref, o_ref):
    # layer 1: relu(x @ W1 + b1)   (matmul in weight dtype, accumulate in f32)
    h = jnp.dot(x_ref[...].astype(w1_ref.dtype), w1_ref[...],
                preferred_element_type=jnp.float32)
    h = jnp.maximum(h + b1_ref[...], 0.0)
    # layer 2: relu(h @ W2 + b2)
    h = jnp.dot(h.astype(w2_ref.dtype), w2_ref[...],
                preferred_element_type=jnp.float32)
    h = jnp.maximum(h + b2_ref[...], 0.0)
    # layer 3: relu(h @ W3 + b3)
    h = jnp.dot(h.astype(w3_ref.dtype), w3_ref[...],
                preferred_element_type=jnp.float32)
    h = jnp.maximum(h + b3_ref[...], 0.0)
    # layer 4 (no activation): h @ W4 + b4 -> direct (block_b, out) store
    y = jnp.dot(h.astype(w4_ref.dtype), w4_ref[...],
                preferred_element_type=jnp.float32)
    o_ref[...] = (y + b4_ref[...]).astype(o_ref.dtype)


def _num_tensorcores_per_chip():
    """2 on v7x (two TensorCores/chip), 1 otherwise. Never raises."""
    try:
        kind = jax.devices()[0].device_kind.lower()
        if "v7" in kind or "7x" in kind:
            return 2
    except Exception:
        pass
    return 1


def linear_qnet_forward(x, params, output_size, *, num_batch_tiles=None):
    """Fused 4-layer MLP forward. Returns (B, output_size) float32."""
    w1, b1, w2, b2, w3, b3, w4, b4 = params
    B, IN = x.shape

    if num_batch_tiles is None:
        num_batch_tiles = _num_tensorcores_per_chip()
    num_batch_tiles = max(1, int(num_batch_tiles))

    # Pad the batch so each tile's row count is a multiple of 8 (sublane
    # granularity) and the tiles divide the batch evenly.
    row_quantum = 8 * num_batch_tiles
    B_pad = ((B + row_quantum - 1) // row_quantum) * row_quantum
    x_p = x if B_pad == B else jnp.pad(x, ((0, B_pad - B), (0, 0)))
    block_b = B_pad // num_batch_tiles

    def _call(single_buffer_weights):
        def full(a):
            # Full-array block, constant index_map -> stays VMEM-resident
            # across grid steps; single-buffered since it never changes.
            if single_buffer_weights:
                return pl.BlockSpec(a.shape, lambda i: (0, 0),
                                    pipeline_mode=pl.Buffered(1))
            return pl.BlockSpec(a.shape, lambda i: (0, 0))

        return pl.pallas_call(
            _qnet_kernel,
            out_shape=jax.ShapeDtypeStruct((B_pad, output_size), jnp.float32),
            grid=(num_batch_tiles,),
            in_specs=[
                pl.BlockSpec((block_b, IN), lambda i: (i, 0)),  # x: batch-tiled
                full(w1), full(b1),
                full(w2), full(b2),
                full(w3), full(b3),
                full(w4), full(b4),
            ],
            out_specs=pl.BlockSpec((block_b, output_size), lambda i: (i, 0)),
            compiler_params=pltpu.CompilerParams(
                dimension_semantics=("parallel",)),
        )(x_p, w1, b1, w2, b2, w3, b3, w4, b4)

    try:
        out = _call(True)
    except Exception:
        # Fallback if single-buffered pipeline_mode is rejected by this JAX.
        out = _call(False)

    return out if B_pad == B else out[:B]


def init_params(key, input_size, hidden_size, output_size):
    """PyTorch-nn.Linear-style init (uniform(-1/sqrt(fan_in), +1/sqrt(fan_in))).

    Weights are stored [in, out] (== PyTorch weight.T) so the kernel computes
    y = x @ W + b. Biases are kept f32 (bias+ReLU happens in the f32
    accumulator regardless of weight dtype).
    """
    h1 = hidden_size
    h2 = hidden_size // 2
    h3 = hidden_size // 4
    keys = jax.random.split(key, 8)

    def lin(kw, kb, fan_in, fan_out):
        bound = 1.0 / jnp.sqrt(jnp.float32(fan_in))
        w = jax.random.uniform(kw, (fan_in, fan_out), jnp.float32, -bound, bound)
        b = jax.random.uniform(kb, (1, fan_out), jnp.float32, -bound, bound)
        return w, b

    w1, b1 = lin(keys[0], keys[1], input_size, h1)
    w2, b2 = lin(keys[2], keys[3], h1, h2)
    w3, b3 = lin(keys[4], keys[5], h2, h3)
    w4, b4 = lin(keys[6], keys[7], h3, output_size)
    return (w1, b1, w2, b2, w3, b3, w4, b4)


def _reference(x, params):
    w1, b1, w2, b2, w3, b3, w4, b4 = params
    r = jnp.maximum(x @ w1 + b1, 0.0)
    r = jnp.maximum(r @ w2 + b2, 0.0)
    r = jnp.maximum(r @ w3 + b3, 0.0)
    return r @ w4 + b4


if __name__ == "__main__":
    # Q-network shapes: input=16, hidden=32 (-> 16 -> 8), output=4.
    B, IN, H, OUT = 256, 16, 32, 4

    key = jax.random.PRNGKey(0)
    kx, kp = jax.random.split(key)
    x = jax.random.normal(kx, (B, IN), jnp.float32)
    params = init_params(kp, IN, H, OUT)

    # --- f32 path: exact check against the pure-JAX reference ---
    out = jax.block_until_ready(linear_qnet_forward(x, params, OUT))
    ref = _reference(x, params)
    assert out.shape == (B, OUT)
    assert jnp.allclose(out, ref, atol=1e-5, rtol=1e-5)

    # --- bf16-weight path (optional perf mode): loose tolerance ---
    params_bf16 = tuple(p.astype(jnp.bfloat16) if i % 2 == 0 else p
                        for i, p in enumerate(params))  # weights bf16, biases f32
    out_bf16 = jax.block_until_ready(linear_qnet_forward(x, params_bf16, OUT))
    assert out_bf16.shape == (B, OUT)
    assert jnp.allclose(out_bf16, ref, atol=5e-2, rtol=5e-2)

    print("KERNEL_OK")
</pallas_src>

<mosaic_0001>
module attributes {stable_mosaic.version = 11 : i64} {
  func.func @_qnet_kernel(%arg0: i32, %arg1: memref<256x16xf32, #tpu.memory_space<vmem>>, %arg2: memref<16x32xf32, #tpu.memory_space<vmem>>, %arg3: memref<1x32xf32, #tpu.memory_space<vmem>>, %arg4: memref<32x16xf32, #tpu.memory_space<vmem>>, %arg5: memref<1x16xf32, #tpu.memory_space<vmem>>, %arg6: memref<16x8xf32, #tpu.memory_space<vmem>>, %arg7: memref<1x8xf32, #tpu.memory_space<vmem>>, %arg8: memref<8x4xf32, #tpu.memory_space<vmem>>, %arg9: memref<1x4xf32, #tpu.memory_space<vmem>>, %arg10: memref<256x4xf32, #tpu.memory_space<vmem>>) attributes {dimension_semantics = [#tpu.dimension_semantics<parallel>], iteration_bounds = array<i64: 1>, scalar_prefetch = 0 : i64, scratch_operands = 0 : i64, tpu.core_type = #tpu.core_type<tc>, window_params = [{transform_indices = @transform_0, window_bounds = array<i64: 256, 16>}, {pipeline_mode = #tpu.pipeline_mode<synchronous>, transform_indices = @transform_1, window_bounds = array<i64: 16, 32>}, {pipeline_mode = #tpu.pipeline_mode<synchronous>, transform_indices = @transform_2, window_bounds = array<i64: 1, 32>}, {pipeline_mode = #tpu.pipeline_mode<synchronous>, transform_indices = @transform_3, window_bounds = array<i64: 32, 16>}, {pipeline_mode = #tpu.pipeline_mode<synchronous>, transform_indices = @transform_4, window_bounds = array<i64: 1, 16>}, {pipeline_mode = #tpu.pipeline_mode<synchronous>, transform_indices = @transform_5, window_bounds = array<i64: 16, 8>}, {pipeline_mode = #tpu.pipeline_mode<synchronous>, transform_indices = @transform_6, window_bounds = array<i64: 1, 8>}, {pipeline_mode = #tpu.pipeline_mode<synchronous>, transform_indices = @transform_7, window_bounds = array<i64: 8, 4>}, {pipeline_mode = #tpu.pipeline_mode<synchronous>, transform_indices = @transform_8, window_bounds = array<i64: 1, 4>}, {transform_indices = @transform_9, window_bounds = array<i64: 256, 4>}]} {
    %c0 = arith.constant 0 : index
    %c0_0 = arith.constant 0 : index
    %0 = vector.load %arg1[%c0, %c0_0] : memref<256x16xf32, #tpu.memory_space<vmem>>, vector<256x16xf32>
    %c0_1 = arith.constant 0 : index
    %c0_2 = arith.constant 0 : index
    %1 = vector.load %arg2[%c0_1, %c0_2] : memref<16x32xf32, #tpu.memory_space<vmem>>, vector<16x32xf32>
    %cst = arith.constant dense<0.000000e+00> : vector<256x32xf32>
    %2 = tpu.matmul %0, %1, %cst {dimension_numbers = #tpu.dot_dimension_numbers<[1], [0], [0], [1], [0, 0, 1, 1], [], []>} : vector<256x16xf32>, vector<16x32xf32>, vector<256x32xf32> -> vector<256x32xf32>
    %c0_3 = arith.constant 0 : index
    %c0_4 = arith.constant 0 : index
    %3 = vector.load %arg3[%c0_3, %c0_4] : memref<1x32xf32, #tpu.memory_space<vmem>>, vector<1x32xf32>
    %4 = vector.broadcast %3 : vector<1x32xf32> to vector<256x32xf32>
    %5 = arith.addf %2, %4 : vector<256x32xf32>
    %cst_5 = arith.constant 0.000000e+00 : f32
    %6 = vector.broadcast %cst_5 : f32 to vector<256x32xf32>
    %7 = arith.maximumf %5, %6 : vector<256x32xf32>
    %c0_6 = arith.constant 0 : index
    %c0_7 = arith.constant 0 : index
    %8 = vector.load %arg4[%c0_6, %c0_7] : memref<32x16xf32, #tpu.memory_space<vmem>>, vector<32x16xf32>
    %cst_8 = arith.constant dense<0.000000e+00> : vector<256x16xf32>
    %9 = tpu.matmul %7, %8, %cst_8 {dimension_numbers = #tpu.dot_dimension_numbers<[1], [0], [0], [1], [0, 0, 1, 1], [], []>} : vector<256x32xf32>, vector<32x16xf32>, vector<256x16xf32> -> vector<256x16xf32>
    %c0_9 = arith.constant 0 : index
    %c0_10 = arith.constant 0 : index
    %10 = vector.load %arg5[%c0_9, %c0_10] : memref<1x16xf32, #tpu.memory_space<vmem>>, vector<1x16xf32>
    %11 = vector.broadcast %10 : vector<1x16xf32> to vector<256x16xf32>
    %12 = arith.addf %9, %11 : vector<256x16xf32>
    %cst_11 = arith.constant 0.000000e+00 : f32
    %13 = vector.broadcast %cst_11 : f32 to vector<256x16xf32>
    %14 = arith.maximumf %12, %13 : vector<256x16xf32>
    %c0_12 = arith.constant 0 : index
    %c0_13 = arith.constant 0 : index
    %15 = vector.load %arg6[%c0_12, %c0_13] : memref<16x8xf32, #tpu.memory_space<vmem>>, vector<16x8xf32>
    %cst_14 = arith.constant dense<0.000000e+00> : vector<256x8xf32>
    %16 = tpu.matmul %14, %15, %cst_14 {dimension_numbers = #tpu.dot_dimension_numbers<[1], [0], [0], [1], [0, 0, 1, 1], [], []>} : vector<256x16xf32>, vector<16x8xf32>, vector<256x8xf32> -> vector<256x8xf32>
    %c0_15 = arith.constant 0 : index
    %c0_16 = arith.constant 0 : index
    %17 = vector.load %arg7[%c0_15, %c0_16] : memref<1x8xf32, #tpu.memory_space<vmem>>, vector<1x8xf32>
    %18 = vector.broadcast %17 : vector<1x8xf32> to vector<256x8xf32>
    %19 = arith.addf %16, %18 : vector<256x8xf32>
    %cst_17 = arith.constant 0.000000e+00 : f32
    %20 = vector.broadcast %cst_17 : f32 to vector<256x8xf32>
    %21 = arith.maximumf %19, %20 : vector<256x8xf32>
    %c0_18 = arith.constant 0 : index
    %c0_19 = arith.constant 0 : index
    %22 = vector.load %arg8[%c0_18, %c0_19] : memref<8x4xf32, #tpu.memory_space<vmem>>, vector<8x4xf32>
    %cst_20 = arith.constant dense<0.000000e+00> : vector<256x4xf32>
    %23 = tpu.matmul %21, %22, %cst_20 {dimension_numbers = #tpu.dot_dimension_numbers<[1], [0], [0], [1], [0, 0, 1, 1], [], []>} : vector<256x8xf32>, vector<8x4xf32>, vector<256x4xf32> -> vector<256x4xf32>
    %c0_21 = arith.constant 0 : index
    %c0_22 = arith.constant 0 : index
    %24 = vector.load %arg9[%c0_21, %c0_22] : memref<1x4xf32, #tpu.memory_space<vmem>>, vector<1x4xf32>
    %25 = vector.broadcast %24 : vector<1x4xf32> to vector<256x4xf32>
    %26 = arith.addf %23, %25 : vector<256x4xf32>
    %c0_23 = arith.constant 0 : index
    %c0_24 = arith.constant 0 : index
    %27 = vector.load %arg10[%c0_23, %c0_24] : memref<256x4xf32, #tpu.memory_space<vmem>>, vector<256x4xf32>
    tpu.vector_store %arg10[%c0_23, %c0_24], %26 {strides = array<i32>} : memref<256x4xf32, #tpu.memory_space<vmem>>, vector<256x4xf32>,
    return
  }
  func.func @transform_0(%arg0: i32) -> (i32, i32) {
    %c0_i32 = arith.constant 0 : i32
    %c0_i32_0 = arith.constant 0 : i32
    return %arg0, %c0_i32 : i32, i32
  }
  func.func @transform_1(%arg0: i32) -> (i32, i32) {
    %c0_i32 = arith.constant 0 : i32
    %c0_i32_0 = arith.constant 0 : i32
    %c0_i32_1 = arith.constant 0 : i32
    return %c0_i32, %c0_i32_0 : i32, i32
  }
  func.func @transform_2(%arg0: i32) -> (i32, i32) {
    %c0_i32 = arith.constant 0 : i32
    %c0_i32_0 = arith.constant 0 : i32
    %c0_i32_1 = arith.constant 0 : i32
    return %c0_i32, %c0_i32_0 : i32, i32
  }
  func.func @transform_3(%arg0: i32) -> (i32, i32) {
    %c0_i32 = arith.constant 0 : i32
    %c0_i32_0 = arith.constant 0 : i32
    %c0_i32_1 = arith.constant 0 : i32
    return %c0_i32, %c0_i32_0 : i32, i32
  }
  func.func @transform_4(%arg0: i32) -> (i32, i32) {
    %c0_i32 = arith.constant 0 : i32
    %c0_i32_0 = arith.constant 0 : i32
    %c0_i32_1 = arith.constant 0 : i32
    return %c0_i32, %c0_i32_0 : i32, i32
  }
  func.func @transform_5(%arg0: i32) -> (i32, i32) {
    %c0_i32 = arith.constant 0 : i32
    %c0_i32_0 = arith.constant 0 : i32
    %c0_i32_1 = arith.constant 0 : i32
    return %c0_i32, %c0_i32_0 : i32, i32
  }
  func.func @transform_6(%arg0: i32) -> (i32, i32) {
    %c0_i32 = arith.constant 0 : i32
    %c0_i32_0 = arith.constant 0 : i32
    %c0_i32_1 = arith.constant 0 : i32
    return %c0_i32, %c0_i32_0 : i32, i32
  }
  func.func @transform_7(%arg0: i32) -> (i32, i32) {
    %c0_i32 = arith.constant 0 : i32
    %c0_i32_0 = arith.constant 0 : i32
    %c0_i32_1 = arith.constant 0 : i32
    return %c0_i32, %c0_i32_0 : i32, i32
  }
  func.func @transform_8(%arg0: i32) -> (i32, i32) {
    %c0_i32 = arith.constant 0 : i32
    %c0_i32_0 = arith.constant 0 : i32
    %c0_i32_1 = arith.constant 0 : i32
    return %c0_i32, %c0_i32_0 : i32, i32
  }
  func.func @transform_9(%arg0: i32) -> (i32, i32) {
    %c0_i32 = arith.constant 0 : i32
    %c0_i32_0 = arith.constant 0 : i32
    return %arg0, %c0_i32 : i32, i32
  }
}

module attributes {stable_mosaic.version = 11 : i64} {
  func.func @_qnet_kernel(%arg0: i32, %arg1: memref<256x16xf32, #tpu.memory_space<vmem>>, %arg2: memref<16x32xf32, #tpu.memory_space<vmem>>, %arg3: memref<1x32xf32, #tpu.memory_space<vmem>>, %arg4: memref<32x16xf32, #tpu.memory_space<vmem>>, %arg5: memref<1x16xf32, #tpu.memory_space<vmem>>, %arg6: memref<16x8xf32, #tpu.memory_space<vmem>>, %arg7: memref<1x8xf32, #tpu.memory_space<vmem>>, %arg8: memref<8x4xf32, #tpu.memory_space<vmem>>, %arg9: memref<1x4xf32, #tpu.memory_space<vmem>>, %arg10: memref<256x4xf32, #tpu.memory_space<vmem>>) attributes {dimension_semantics = [#tpu.dimension_semantics<parallel>], iteration_bounds = array<i64: 1>, scalar_prefetch = 0 : i64, scratch_operands = 0 : i64, tpu.core_type = #tpu.core_type<tc>, window_params = [{transform_indices = @transform_0, window_bounds = array<i64: 256, 16>}, {pipeline_mode = #tpu.pipeline_mode<synchronous>, transform_indices = @transform_1, window_bounds = array<i64: 16, 32>}, {pipeline_mode = #tpu.pipeline_mode<synchronous>, transform_indices = @transform_2, window_bounds = array<i64: 1, 32>}, {pipeline_mode = #tpu.pipeline_mode<synchronous>, transform_indices = @transform_3, window_bounds = array<i64: 32, 16>}, {pipeline_mode = #tpu.pipeline_mode<synchronous>, transform_indices = @transform_4, window_bounds = array<i64: 1, 16>}, {pipeline_mode = #tpu.pipeline_mode<synchronous>, transform_indices = @transform_5, window_bounds = array<i64: 16, 8>}, {pipeline_mode = #tpu.pipeline_mode<synchronous>, transform_indices = @transform_6, window_bounds = array<i64: 1, 8>}, {pipeline_mode = #tpu.pipeline_mode<synchronous>, transform_indices = @transform_7, window_bounds = array<i64: 8, 4>}, {pipeline_mode = #tpu.pipeline_mode<synchronous>, transform_indices = @transform_8, window_bounds = array<i64: 1, 4>}, {transform_indices = @transform_9, window_bounds = array<i64: 256, 4>}]} {
    %c0 = arith.constant 0 : index
    %c0_0 = arith.constant 0 : index
    %0 = vector.load %arg1[%c0, %c0_0] : memref<256x16xf32, #tpu.memory_space<vmem>>, vector<256x16xf32>
    %c0_1 = arith.constant 0 : index
    %c0_2 = arith.constant 0 : index
    %1 = vector.load %arg2[%c0_1, %c0_2] : memref<16x32xf32, #tpu.memory_space<vmem>>, vector<16x32xf32>
    %cst = arith.constant dense<0.000000e+00> : vector<256x32xf32>
    %2 = tpu.matmul %0, %1, %cst {dimension_numbers = #tpu.dot_dimension_numbers<[1], [0], [0], [1], [0, 0, 1, 1], [], []>} : vector<256x16xf32>, vector<16x32xf32>, vector<256x32xf32> -> vector<256x32xf32>
    %c0_3 = arith.constant 0 : index
    %c0_4 = arith.constant 0 : index
    %3 = vector.load %arg3[%c0_3, %c0_4] : memref<1x32xf32, #tpu.memory_space<vmem>>, vector<1x32xf32>
    %4 = vector.broadcast %3 : vector<1x32xf32> to vector<256x32xf32>
    %5 = arith.addf %2, %4 : vector<256x32xf32>
    %cst_5 = arith.constant 0.000000e+00 : f32
    %6 = vector.broadcast %cst_5 : f32 to vector<256x32xf32>
    %7 = arith.maximumf %5, %6 : vector<256x32xf32>
    %c0_6 = arith.constant 0 : index
    %c0_7 = arith.constant 0 : index
    %8 = vector.load %arg4[%c0_6, %c0_7] : memref<32x16xf32, #tpu.memory_space<vmem>>, vector<32x16xf32>
    %cst_8 = arith.constant dense<0.000000e+00> : vector<256x16xf32>
    %9 = tpu.matmul %7, %8, %cst_8 {dimension_numbers = #tpu.dot_dimension_numbers<[1], [0], [0], [1], [0, 0, 1, 1], [], []>} : vector<256x32xf32>, vector<32x16xf32>, vector<256x16xf32> -> vector<256x16xf32>
    %c0_9 = arith.constant 0 : index
    %c0_10 = arith.constant 0 : index
    %10 = vector.load %arg5[%c0_9, %c0_10] : memref<1x16xf32, #tpu.memory_space<vmem>>, vector<1x16xf32>
    %11 = vector.broadcast %10 : vector<1x16xf32> to vector<256x16xf32>
    %12 = arith.addf %9, %11 : vector<256x16xf32>
    %cst_11 = arith.constant 0.000000e+00 : f32
    %13 = vector.broadcast %cst_11 : f32 to vector<256x16xf32>
    %14 = arith.maximumf %12, %13 : vector<256x16xf32>
    %c0_12 = arith.constant 0 : index
    %c0_13 = arith.constant 0 : index
    %15 = vector.load %arg6[%c0_12, %c0_13] : memref<16x8xf32, #tpu.memory_space<vmem>>, vector<16x8xf32>
    %cst_14 = arith.constant dense<0.000000e+00> : vector<256x8xf32>
    %16 = tpu.matmul %14, %15, %cst_14 {dimension_numbers = #tpu.dot_dimension_numbers<[1], [0], [0], [1], [0, 0, 1, 1], [], []>} : vector<256x16xf32>, vector<16x8xf32>, vector<256x8xf32> -> vector<256x8xf32>
    %c0_15 = arith.constant 0 : index
    %c0_16 = arith.constant 0 : index
    %17 = vector.load %arg7[%c0_15, %c0_16] : memref<1x8xf32, #tpu.memory_space<vmem>>, vector<1x8xf32>
    %18 = vector.broadcast %17 : vector<1x8xf32> to vector<256x8xf32>
    %19 = arith.addf %16, %18 : vector<256x8xf32>
    %cst_17 = arith.constant 0.000000e+00 : f32
    %20 = vector.broadcast %cst_17 : f32 to vector<256x8xf32>
    %21 = arith.maximumf %19, %20 : vector<256x8xf32>
    %c0_18 = arith.constant 0 : index
    %c0_19 = arith.constant 0 : index
    %22 = vector.load %arg8[%c0_18, %c0_19] : memref<8x4xf32, #tpu.memory_space<vmem>>, vector<8x4xf32>
    %cst_20 = arith.constant dense<0.000000e+00> : vector<256x4xf32>
    %23 = tpu.matmul %21, %22, %cst_20 {dimension_numbers = #tpu.dot_dimension_numbers<[1], [0], [0], [1], [0, 0, 1, 1], [], []>} : vector<256x8xf32>, vector<8x4xf32>, vector<256x4xf32> -> vector<256x4xf32>
    %c0_21 = arith.constant 0 : index
    %c0_22 = arith.constant 0 : index
    %24 = vector.load %arg9[%c0_21, %c0_22] : memref<1x4xf32, #tpu.memory_space<vmem>>, vector<1x4xf32>
    %25 = vector.broadcast %24 : vector<1x4xf32> to vector<256x4xf32>
    %26 = arith.addf %23, %25 : vector<256x4xf32>
    %c0_23 = arith.constant 0 : index
    %c0_24 = arith.constant 0 : index
    %27 = vector.load %arg10[%c0_23, %c0_24] : memref<256x4xf32, #tpu.memory_space<vmem>>, vector<256x4xf32>
    tpu.vector_store %arg10[%c0_23, %c0_24], %26 {strides = array<i32>} : memref<256x4xf32, #tpu.memory_space<vmem>>, vector<256x4xf32>,
    return
  }
  func.func @transform_0(%arg0: i32) -> (i32, i32) {
    %c0_i32 = arith.constant 0 : i32
    %c0_i32_0 = arith.constant 0 : i32
    return %arg0, %c0_i32 : i32, i32
  }
  func.func @transform_1(%arg0: i32) -> (i32, i32) {
    %c0_i32 = arith.constant 0 : i32
    %c0_i32_0 = arith.constant 0 : i32
    %c0_i32_1 = arith.constant 0 : i32
    return %c0_i32, %c0_i32_0 : i32, i32
  }
  func.func @transform_2(%arg0: i32) -> (i32, i32) {
    %c0_i32 = arith.constant 0 : i32
    %c0_i32_0 = arith.constant 0 : i32
    %c0_i32_1 = arith.constant 0 : i32
    return %c0_i32, %c0_i32_0 : i32, i32
  }
  func.func @transform_3(%arg0: i32) -> (i32, i32) {
    %c0_i32 = arith.constant 0 : i32
    %c0_i32_0 = arith.constant 0 : i32
    %c0_i32_1 = arith.constant 0 : i32
    return %c0_i32, %c0_i32_0 : i32, i32
  }
  func.func @transform_4(%arg0: i32) -> (i32, i32) {
    %c0_i32 = arith.constant 0 : i32
    %c0_i32_0 = arith.constant 0 : i32
    %c0_i32_1 = arith.constant 0 : i32
    return %c0_i32, %c0_i32_0 : i32, i32
  }
  func.func @transform_5(%arg0: i32) -> (i32, i32) {
    %c0_i32 = arith.constant 0 : i32
    %c0_i32_0 = arith.constant 0 : i32
    %c0_i32_1 = arith.constant 0 : i32
    return %c0_i32, %c0_i32_0 : i32, i32
  }
  func.func @transform_6(%arg0: i32) -> (i32, i32) {
    %c0_i32 = arith.constant 0 : i32
    %c0_i32_0 = arith.constant 0 : i32
    %c0_i32_1 = arith.constant 0 : i32
    return %c0_i32, %c0_i32_0 : i32, i32
  }
  func.func @transform_7(%arg0: i32) -> (i32, i32) {
    %c0_i32 = arith.constant 0 : i32
    %c0_i32_0 = arith.constant 0 : i32
    %c0_i32_1 = arith.constant 0 : i32
    return %c0_i32, %c0_i32_0 : i32, i32
  }
  func.func @transform_8(%arg0: i32) -> (i32, i32) {
    %c0_i32 = arith.constant 0 : i32
    %c0_i32_0 = arith.constant 0 : i32
    %c0_i32_1 = arith.constant 0 : i32
    return %c0_i32, %c0_i32_0 : i32, i32
  }
  func.func @transform_9(%arg0: i32) -> (i32, i32) {
    %c0_i32 = arith.constant 0 : i32
    %c0_i32_0 = arith.constant 0 : i32
    return %arg0, %c0_i32 : i32, i32
  }
}

</mosaic_0001>

<llo_original>
// kernel: tpu_custom_call.1
$region0: #{tpu_custom_call.1}
  #allocation0 [shape = 'u32[]', space=smem, size = 0x4, offset = 0x4, fixed_abs, tag = 'smem constant byte address 0x4 - core index']
  #allocation1 [shape = 'u32[144,128]{1,0:T(1,128)}', space=vmem, size = 0x12000, scoped, tag = 'internal scratch']
  %s0 = inlined_call_operand.vmem [shape: f32[256,16], index: 0, kind: input, shape index: {}]
  %s1 = inlined_call_operand.vmem [shape: f32[16,32], index: 1, kind: input, shape index: {}]
  %s2 = inlined_call_operand.vmem [shape: f32[1,32], index: 2, kind: input, shape index: {}]
  %s3 = inlined_call_operand.vmem [shape: f32[32,16], index: 3, kind: input, shape index: {}]
  %s4 = inlined_call_operand.vmem [shape: f32[1,16], index: 4, kind: input, shape index: {}]
  %s5 = inlined_call_operand.vmem [shape: f32[16,8], index: 5, kind: input, shape index: {}]
  %s6 = inlined_call_operand.vmem [shape: f32[1,8], index: 6, kind: input, shape index: {}]
  %s7 = inlined_call_operand.vmem [shape: f32[8,4], index: 7, kind: input, shape index: {}]
  %s8 = inlined_call_operand.vmem [shape: f32[1,4], index: 8, kind: input, shape index: {}]
  %s9 = inlined_call_operand.vmem [shape: f32[256,4], index: 9, kind: output, shape index: {}]
  %s10 = sld [smem:[#allocation0]]
  $region46: #{tpu_custom_call.1} parent=0
    _
  %s12 = ssub.s32 1, %s10
  %s13 = scalar_select 0, %s12, %s10
  // Predicated region
  $region2: #{tpu_custom_call.1} parent=0 // pred_check
    _
  $region3: #{tpu_custom_call.1} parent=0 // pred_check_branch
    %15 = sbr.rel (0) target = $region5
  $region4: #{tpu_custom_call.1} parent=0 // pred_region
    _
  $region5: #{tpu_custom_call.1} parent=0 // pred_fallthru
    _
  // Predicated region
  $region6: #{tpu_custom_call.1} parent=0 // pred_check
    _
  $region7: #{tpu_custom_call.1} parent=0 // pred_check_branch
    %17 = sbr.rel (0) target = $region9
  $region8: #{tpu_custom_call.1} parent=0 // pred_region
    _
  $region9: #{tpu_custom_call.1} parent=0 // pred_fallthru
    _
  // Predicated region
  $region10: #{tpu_custom_call.1} parent=0 // pred_check
    _
  $region11: #{tpu_custom_call.1} parent=0 // pred_check_branch
    %19 = sbr.rel (0) target = $region13
  $region12: #{tpu_custom_call.1} parent=0 // pred_region
    _
  $region13: #{tpu_custom_call.1} parent=0 // pred_fallthru
    _
  // Predicated region
  $region14: #{tpu_custom_call.1} parent=0 // pred_check
    _
  $region15: #{tpu_custom_call.1} parent=0 // pred_check_branch
    %21 = sbr.rel (0) target = $region17
  $region16: #{tpu_custom_call.1} parent=0 // pred_region
    _
  $region17: #{tpu_custom_call.1} parent=0 // pred_fallthru
    _
  // Predicated region
  $region18: #{tpu_custom_call.1} parent=0 // pred_check
    _
  $region19: #{tpu_custom_call.1} parent=0 // pred_check_branch
    %23 = sbr.rel (0) target = $region21
  $region20: #{tpu_custom_call.1} parent=0 // pred_region
    _
  $region21: #{tpu_custom_call.1} parent=0 // pred_fallthru
    _
  // Predicated region
  $region22: #{tpu_custom_call.1} parent=0 // pred_check
    _
  $region23: #{tpu_custom_call.1} parent=0 // pred_check_branch
    %25 = sbr.rel (0) target = $region25
  $region24: #{tpu_custom_call.1} parent=0 // pred_region
    _
  $region25: #{tpu_custom_call.1} parent=0 // pred_fallthru
    _
  // Predicated region
  $region26: #{tpu_custom_call.1} parent=0 // pred_check
    _
  $region27: #{tpu_custom_call.1} parent=0 // pred_check_branch
    %27 = sbr.rel (0) target = $region29
  $region28: #{tpu_custom_call.1} parent=0 // pred_region
    _
  $region29: #{tpu_custom_call.1} parent=0 // pred_fallthru
    _
  // Predicated region
  $region30: #{tpu_custom_call.1} parent=0 // pred_check
    _
  $region31: #{tpu_custom_call.1} parent=0 // pred_check_branch
    %29 = sbr.rel (0) target = $region33
  $region32: #{tpu_custom_call.1} parent=0 // pred_region
    _
  $region33: #{tpu_custom_call.1} parent=0 // pred_fallthru
    _
  // Predicated region
  $region34: #{tpu_custom_call.1} parent=0 // pred_check
    _
  $region35: #{tpu_custom_call.1} parent=0 // pred_check_branch
    %31 = sbr.rel (0) target = $region37
  $region36: #{tpu_custom_call.1} parent=0 // pred_region
    _
  $region37: #{tpu_custom_call.1} parent=0 // pred_fallthru
    _
  %v32 = vld [vmem:[%s0] sm:$0xff]
  %v33 = vld [vmem:[%s0 + $0x8] sm:$0xff]
  %v34 = vld [vmem:[%s0 + $0x10] sm:$0xff]
  %v35 = vld [vmem:[%s0 + $0x18] sm:$0xff]
  %v36 = vld [vmem:[%s0 + $0x20] sm:$0xff]
  %v37 = vld [vmem:[%s0 + $0x28] sm:$0xff]
  %v38 = vld [vmem:[%s0 + $0x30] sm:$0xff]
  %v39 = vld [vmem:[%s0 + $0x38] sm:$0xff]
  %v40 = vld [vmem:[%s0 + $0x40] sm:$0xff]
  %v41 = vld [vmem:[%s0 + $0x48] sm:$0xff]
  %v42 = vld [vmem:[%s0 + $0x50] sm:$0xff]
  %v43 = vld [vmem:[%s0 + $0x58] sm:$0xff]
  %v44 = vld [vmem:[%s0 + $0x60] sm:$0xff]
  %v45 = vld [vmem:[%s0 + $0x68] sm:$0xff]
  %v46 = vld [vmem:[%s0 + $0x70] sm:$0xff]
  %v47 = vld [vmem:[%s0 + $0x78] sm:$0xff]
  %v48 = vld [vmem:[%s0 + $0x80] sm:$0xff]
  %v49 = vld [vmem:[%s0 + $0x88] sm:$0xff]
  %v50 = vld [vmem:[%s0 + $0x90] sm:$0xff]
  %v51 = vld [vmem:[%s0 + $0x98] sm:$0xff]
  %v52 = vld [vmem:[%s0 + $0xa0] sm:$0xff]
  %v53 = vld [vmem:[%s0 + $0xa8] sm:$0xff]
  %v54 = vld [vmem:[%s0 + $0xb0] sm:$0xff]
  %v55 = vld [vmem:[%s0 + $0xb8] sm:$0xff]
  %v56 = vld [vmem:[%s0 + $0xc0] sm:$0xff]
  %v57 = vld [vmem:[%s0 + $0xc8] sm:$0xff]
  %v58 = vld [vmem:[%s0 + $0xd0] sm:$0xff]
  %v59 = vld [vmem:[%s0 + $0xd8] sm:$0xff]
  %v60 = vld [vmem:[%s0 + $0xe0] sm:$0xff]
  %v61 = vld [vmem:[%s0 + $0xe8] sm:$0xff]
  %v62 = vld [vmem:[%s0 + $0xf0] sm:$0xff]
  %v63 = vld [vmem:[%s0 + $0xf8] sm:$0xff]
  %v64 = vld [vmem:[%s1] sm:$0xff]
  %v65 = vld [vmem:[%s1 + $0x8] sm:$0xff]
  %v66 = vld [vmem:[%s2] sm:$0x1]
  %v68 = vlaneseq
  %v69 = vshrl.u32 %v68, 7
  %v70 = vsub.s32 0, %v69
  %v71 = vrot.slane %v66, %v70
  %vm73 = vcmask 130048
  %v75 = vsel %vm73, %v32, 0
  %v78 = vsel %vm73, %v33, 0
  %v81 = vsel %vm73, %v34, 0
  %v84 = vsel %vm73, %v35, 0
  %v87 = vsel %vm73, %v36, 0
  %v90 = vsel %vm73, %v37, 0
  %v93 = vsel %vm73, %v38, 0
  %v96 = vsel %vm73, %v39, 0
  %v99 = vsel %vm73, %v40, 0
  %v102 = vsel %vm73, %v41, 0
  %v105 = vsel %vm73, %v42, 0
  %v108 = vsel %vm73, %v43, 0
  %v111 = vsel %vm73, %v44, 0
  %v114 = vsel %vm73, %v45, 0
  %v117 = vsel %vm73, %v46, 0
  %v120 = vsel %vm73, %v47, 0
  %v123 = vsel %vm73, %v48, 0
  %v126 = vsel %vm73, %v49, 0
  %v129 = vsel %vm73, %v50, 0
  %v132 = vsel %vm73, %v51, 0
  %v135 = vsel %vm73, %v52, 0
  %v138 = vsel %vm73, %v53, 0
  %v141 = vsel %vm73, %v54, 0
  %v144 = vsel %vm73, %v55, 0
  %v147 = vsel %vm73, %v56, 0
  %v150 = vsel %vm73, %v57, 0
  %v153 = vsel %vm73, %v58, 0
  %v156 = vsel %vm73, %v59, 0
  %v159 = vsel %vm73, %v60, 0
  %v162 = vsel %vm73, %v61, 0
  %v165 = vsel %vm73, %v62, 0
  %v168 = vsel %vm73, %v63, 0
  %170 = vmatprep.subr.mxu0 0.0
  %171 = vmatpush1.msra.mxu0 %v64
  %172 = vmatprep.subr.mxu0 0.0
  %173 = vmatpush1.msra.mxu0 %v65
  %174 = vmatprep.subr.mxu0 0.0
  %175 = vmatpush1.msra.mxu0 0.0
  %176 = vmatprep.subr.mxu0 0.0
  %177 = vmatpush1.msra.mxu0 0.0
  %178 = vmatprep.subr.mxu0 0.0
  %179 = vmatpush1.msra.mxu0 0.0
  %180 = vmatprep.subr.mxu0 0.0
  %181 = vmatpush1.msra.mxu0 0.0
  %182 = vmatprep.subr.mxu0 0.0
  %183 = vmatpush1.msra.mxu0 0.0
  %184 = vmatprep.subr.mxu0 0.0
  %185 = vmatpush1.msra.mxu0 0.0
  %186 = vmatprep.subr.mxu0 0.0
  %187 = vmatpush1.msra.mxu0 0.0
  %188 = vmatprep.subr.mxu0 0.0
  %189 = vmatpush1.msra.mxu0 0.0
  %190 = vmatprep.subr.mxu0 0.0
  %191 = vmatpush1.msra.mxu0 0.0
  %192 = vmatprep.subr.mxu0 0.0
  %193 = vmatpush1.msra.mxu0 0.0
  %194 = vmatprep.subr.mxu0 0.0
  %195 = vmatpush1.msra.mxu0 0.0
  %196 = vmatprep.subr.mxu0 0.0
  %197 = vmatpush1.msra.mxu0 0.0
  %198 = vmatprep.subr.mxu0 0.0
  %199 = vmatpush1.msra.mxu0 0.0
  %200 = vmatprep.subr.mxu0 0.0
  %201 = vmatpush1.msra.mxu0 0.0
  %202 = vmatprep.subr.mxu0 0.0
  %203 = vmatpush1.msra.mxu0 0.0
  %204 = vmatprep.subr.mxu0 0.0
  %205 = vmatpush1.msra.mxu0 0.0
  %206 = vmatprep.subr.mxu0 0.0
  %207 = vmatpush1.msra.mxu0 0.0
  %208 = vmatprep.subr.mxu0 0.0
  %209 = vmatpush1.msra.mxu0 0.0
  %210 = vmatprep.subr.mxu0 0.0
  %211 = vmatpush1.msra.mxu0 0.0
  %212 = vmatprep.subr.mxu0 0.0
  %213 = vmatpush1.msra.mxu0 0.0
  %214 = vmatprep.subr.mxu0 0.0
  %215 = vmatpush1.msra.mxu0 0.0
  %216 = vmatprep.subr.mxu0 0.0
  %217 = vmatpush1.msra.mxu0 0.0
  %218 = vmatprep.subr.mxu0 0.0
  %219 = vmatpush1.msra.mxu0 0.0
  %220 = vmatprep.subr.mxu0 0.0
  %221 = vmatpush1.msra.mxu0 0.0
  %222 = vmatprep.subr.mxu0 0.0
  %223 = vmatpush1.msra.mxu0 0.0
  %224 = vmatprep.subr.mxu0 0.0
  %225 = vmatpush1.msra.mxu0 0.0
  %226 = vmatprep.subr.mxu0 0.0
  %227 = vmatpush1.msra.mxu0 0.0
  %228 = vmatprep.subr.mxu0 0.0
  %229 = vmatpush1.msra.mxu0 0.0
  %230 = vmatprep.subr.mxu0 0.0
  %231 = vmatpush1.msra.mxu0 0.0
  %232 = vmatprep.subr.mxu0 0.0
  %233 = vmatpush1.msra.mxu0 0.0
  %234 = vmatprep.mubr.f32.mxu0 0.0
  %235 = vmatmul.mubr.f32.gmra.mrb[0].mxu0 %v75
  %v236 = vpop.f32.mrb[0].mxu0
  %v237 = vadd.f32 %v71, %v236
  %v238 = vpop.f32.mrb[0].mxu0
  %239 = vmatprep.mubr.f32.mxu0 0.0
  %240 = vmatmul.mubr.f32.gmra.mrb[0].mxu0 %v78
  %v241 = vpop.f32.mrb[0].mxu0
  %v242 = vadd.f32 %v71, %v241
  %v243 = vpop.f32.mrb[0].mxu0
  %244 = vmatprep.mubr.f32.mxu0 0.0
  %245 = vmatmul.mubr.f32.gmra.mrb[0].mxu0 %v81
  %v246 = vpop.f32.mrb[0].mxu0
  %v247 = vadd.f32 %v71, %v246
  %v248 = vpop.f32.mrb[0].mxu0
  %249 = vmatprep.mubr.f32.mxu0 0.0
  %250 = vmatmul.mubr.f32.gmra.mrb[0].mxu0 %v84
  %v251 = vpop.f32.mrb[0].mxu0
  %v252 = vadd.f32 %v71, %v251
  %v253 = vpop.f32.mrb[0].mxu0
  %254 = vmatprep.mubr.f32.mxu0 0.0
  %255 = vmatmul.mubr.f32.gmra.mrb[0].mxu0 %v87
  %v256 = vpop.f32.mrb[0].mxu0
  %v257 = vadd.f32 %v71, %v256
  %v258 = vpop.f32.mrb[0].mxu0
  %259 = vmatprep.mubr.f32.mxu0 0.0
  %260 = vmatmul.mubr.f32.gmra.mrb[0].mxu0 %v90
  %v261 = vpop.f32.mrb[0].mxu0
  %v262 = vadd.f32 %v71, %v261
  %v263 = vpop.f32.mrb[0].mxu0
  %264 = vmatprep.mubr.f32.mxu0 0.0
  %265 = vmatmul.mubr.f32.gmra.mrb[0].mxu0 %v93
  %v266 = vpop.f32.mrb[0].mxu0
  %v267 = vadd.f32 %v71, %v266
  %v268 = vpop.f32.mrb[0].mxu0
  %269 = vmatprep.mubr.f32.mxu0 0.0
  %270 = vmatmul.mubr.f32.gmra.mrb[0].mxu0 %v96
  %v271 = vpop.f32.mrb[0].mxu0
  %v272 = vadd.f32 %v71, %v271
  %v273 = vpop.f32.mrb[0].mxu0
  %274 = vmatprep.mubr.f32.mxu0 0.0
  %275 = vmatmul.mubr.f32.gmra.mrb[0].mxu0 %v99
  %v276 = vpop.f32.mrb[0].mxu0
  %v277 = vadd.f32 %v71, %v276
  %v278 = vpop.f32.mrb[0].mxu0
  %279 = vmatprep.mubr.f32.mxu0 0.0
  %280 = vmatmul.mubr.f32.gmra.mrb[0].mxu0 %v102
  %v281 = vpop.f32.mrb[0].mxu0
  %v282 = vadd.f32 %v71, %v281
  %v283 = vpop.f32.mrb[0].mxu0
  %284 = vmatprep.mubr.f32.mxu0 0.0
  %285 = vmatmul.mubr.f32.gmra.mrb[0].mxu0 %v105
  %v286 = vpop.f32.mrb[0].mxu0
  %v287 = vadd.f32 %v71, %v286
  %v288 = vpop.f32.mrb[0].mxu0
  %289 = vmatprep.mubr.f32.mxu0 0.0
  %290 = vmatmul.mubr.f32.gmra.mrb[0].mxu0 %v108
  %v291 = vpop.f32.mrb[0].mxu0
  %v292 = vadd.f32 %v71, %v291
  %v293 = vpop.f32.mrb[0].mxu0
  %294 = vmatprep.mubr.f32.mxu0 0.0
  %295 = vmatmul.mubr.f32.gmra.mrb[0].mxu0 %v111
  %v296 = vpop.f32.mrb[0].mxu0
  %v297 = vadd.f32 %v71, %v296
  %v298 = vpop.f32.mrb[0].mxu0
  %299 = vmatprep.mubr.f32.mxu0 0.0
  %300 = vmatmul.mubr.f32.gmra.mrb[0].mxu0 %v114
  %v301 = vpop.f32.mrb[0].mxu0
  %v302 = vadd.f32 %v71, %v301
  %v303 = vpop.f32.mrb[0].mxu0
  %304 = vmatprep.mubr.f32.mxu0 0.0
  %305 = vmatmul.mubr.f32.gmra.mrb[0].mxu0 %v117
  %v306 = vpop.f32.mrb[0].mxu0
  %v307 = vadd.f32 %v71, %v306
  %v308 = vpop.f32.mrb[0].mxu0
  %309 = vmatprep.mubr.f32.mxu0 0.0
  %310 = vmatmul.mubr.f32.gmra.mrb[0].mxu0 %v120
  %v311 = vpop.f32.mrb[0].mxu0
  %v312 = vadd.f32 %v71, %v311
  %v313 = vpop.f32.mrb[0].mxu0
  %314 = vmatprep.mubr.f32.mxu0 0.0
  %315 = vmatmul.mubr.f32.gmra.mrb[0].mxu0 %v123
  %v316 = vpop.f32.mrb[0].mxu0
  %v317 = vadd.f32 %v71, %v316
  %v318 = vpop.f32.mrb[0].mxu0
  %319 = vmatprep.mubr.f32.mxu0 0.0
  %320 = vmatmul.mubr.f32.gmra.mrb[0].mxu0 %v126
  %v321 = vpop.f32.mrb[0].mxu0
  %v322 = vadd.f32 %v71, %v321
  %v323 = vpop.f32.mrb[0].mxu0
  %324 = vmatprep.mubr.f32.mxu0 0.0
  %325 = vmatmul.mubr.f32.gmra.mrb[0].mxu0 %v129
  %v326 = vpop.f32.mrb[0].mxu0
  %v327 = vadd.f32 %v71, %v326
  %v328 = vpop.f32.mrb[0].mxu0
  %329 = vmatprep.mubr.f32.mxu0 0.0
  %330 = vmatmul.mubr.f32.gmra.mrb[0].mxu0 %v132
  %v331 = vpop.f32.mrb[0].mxu0
  %v332 = vadd.f32 %v71, %v331
  %v333 = vpop.f32.mrb[0].mxu0
  %334 = vmatprep.mubr.f32.mxu0 0.0
  %335 = vmatmul.mubr.f32.gmra.mrb[0].mxu0 %v135
  %v336 = vpop.f32.mrb[0].mxu0
  %v337 = vadd.f32 %v71, %v336
  %v338 = vpop.f32.mrb[0].mxu0
  %339 = vmatprep.mubr.f32.mxu0 0.0
  %340 = vmatmul.mubr.f32.gmra.mrb[0].mxu0 %v138
  %v341 = vpop.f32.mrb[0].mxu0
  %v342 = vadd.f32 %v71, %v341
  %v343 = vpop.f32.mrb[0].mxu0
  %344 = vmatprep.mubr.f32.mxu0 0.0
  %345 = vmatmul.mubr.f32.gmra.mrb[0].mxu0 %v141
  %v346 = vpop.f32.mrb[0].mxu0
  %v347 = vadd.f32 %v71, %v346
  %v348 = vpop.f32.mrb[0].mxu0
  %349 = vmatprep.mubr.f32.mxu0 0.0
  %350 = vmatmul.mubr.f32.gmra.mrb[0].mxu0 %v144
  %v351 = vpop.f32.mrb[0].mxu0
  %v352 = vadd.f32 %v71, %v351
  %v353 = vpop.f32.mrb[0].mxu0
  %354 = vmatprep.mubr.f32.mxu0 0.0
  %355 = vmatmul.mubr.f32.gmra.mrb[0].mxu0 %v147
  %v356 = vpop.f32.mrb[0].mxu0
  %v357 = vadd.f32 %v71, %v356
  %v358 = vpop.f32.mrb[0].mxu0
  %359 = vmatprep.mubr.f32.mxu0 0.0
  %360 = vmatmul.mubr.f32.gmra.mrb[0].mxu0 %v150
  %v361 = vpop.f32.mrb[0].mxu0
  %v362 = vadd.f32 %v71, %v361
  %v363 = vpop.f32.mrb[0].mxu0
  %364 = vmatprep.mubr.f32.mxu0 0.0
  %365 = vmatmul.mubr.f32.gmra.mrb[0].mxu0 %v153
  %v366 = vpop.f32.mrb[0].mxu0
  %v367 = vadd.f32 %v71, %v366
  %v368 = vpop.f32.mrb[0].mxu0
  %369 = vmatprep.mubr.f32.mxu0 0.0
  %370 = vmatmul.mubr.f32.gmra.mrb[0].mxu0 %v156
  %v371 = vpop.f32.mrb[0].mxu0
  %v372 = vadd.f32 %v71, %v371
  %v373 = vpop.f32.mrb[0].mxu0
  %374 = vmatprep.mubr.f32.mxu0 0.0
  %375 = vmatmul.mubr.f32.gmra.mrb[0].mxu0 %v159
  %v376 = vpop.f32.mrb[0].mxu0
  %v377 = vadd.f32 %v71, %v376
  %v378 = vpop.f32.mrb[0].mxu0
  %379 = vmatprep.mubr.f32.mxu0 0.0
  %380 = vmatmul.mubr.f32.gmra.mrb[0].mxu0 %v162
  %v381 = vpop.f32.mrb[0].mxu0
  %v382 = vadd.f32 %v71, %v381
  %v383 = vpop.f32.mrb[0].mxu0
  %384 = vmatprep.mubr.f32.mxu0 0.0
  %385 = vmatmul.mubr.f32.gmra.mrb[0].mxu0 %v165
  %v386 = vpop.f32.mrb[0].mxu0
  %v387 = vadd.f32 %v71, %v386
  %v388 = vpop.f32.mrb[0].mxu0
  %389 = vmatprep.mubr.f32.mxu0 0.0
  %390 = vmatmul.mubr.f32.gmra.mrb[0].mxu0 %v168
  %v391 = vpop.f32.mrb[0].mxu0
  %v392 = vadd.f32 %v71, %v391
  %v393 = vpop.f32.mrb[0].mxu0
  %394 = vdwg.mxu0
  %v395 = vmax.f32 %v237, 0.0
  %v396 = vmax.f32 %v242, 0.0
  %v397 = vmax.f32 %v247, 0.0
  %v398 = vmax.f32 %v252, 0.0
  %v399 = vmax.f32 %v257, 0.0
  %v400 = vmax.f32 %v262, 0.0
  %v401 = vmax.f32 %v267, 0.0
  %v402 = vmax.f32 %v272, 0.0
  %v403 = vmax.f32 %v277, 0.0
  %v404 = vmax.f32 %v282, 0.0
  %v405 = vmax.f32 %v287, 0.0
  %v406 = vmax.f32 %v292, 0.0
  %v407 = vmax.f32 %v297, 0.0
  %v408 = vmax.f32 %v302, 0.0
  %v409 = vmax.f32 %v307, 0.0
  %v410 = vmax.f32 %v312, 0.0
  %v411 = vmax.f32 %v317, 0.0
  %v412 = vmax.f32 %v322, 0.0
  %v413 = vmax.f32 %v327, 0.0
  %v414 = vmax.f32 %v332, 0.0
  %v415 = vmax.f32 %v337, 0.0
  %v416 = vmax.f32 %v342, 0.0
  %v417 = vmax.f32 %v347, 0.0
  %v418 = vmax.f32 %v352, 0.0
  %v419 = vmax.f32 %v357, 0.0
  %v420 = vmax.f32 %v362, 0.0
  %v421 = vmax.f32 %v367, 0.0
  %v422 = vmax.f32 %v372, 0.0
  %v423 = vmax.f32 %v377, 0.0
  %v424 = vmax.f32 %v382, 0.0
  %v425 = vmax.f32 %v387, 0.0
  %v426 = vmax.f32 %v392, 0.0
  %v427 = vld [vmem:[%s3] sm:$0xff]
  %v428 = vld [vmem:[%s3 + $0x8] sm:$0xff]
  %v429 = vld [vmem:[%s3 + $0x10] sm:$0xff]
  %v430 = vld [vmem:[%s3 + $0x18] sm:$0xff]
  %v431 = vld [vmem:[%s4] sm:$0x1]
  %v433 = vlaneseq
  %v434 = vshrl.u32 %v433, 7
  %v435 = vsub.s32 0, %v434
  %v436 = vrot.slane %v431, %v435
  %vm438 = vcmask 261120
  %v440 = vsel %vm438, %v395, 0
  %v443 = vsel %vm438, %v396, 0
  %v446 = vsel %vm438, %v397, 0
  %v449 = vsel %vm438, %v398, 0
  %v452 = vsel %vm438, %v399, 0
  %v455 = vsel %vm438, %v400, 0
  %v458 = vsel %vm438, %v401, 0
  %v461 = vsel %vm438, %v402, 0
  %v464 = vsel %vm438, %v403, 0
  %v467 = vsel %vm438, %v404, 0
  %v470 = vsel %vm438, %v405, 0
  %v473 = vsel %vm438, %v406, 0
  %v476 = vsel %vm438, %v407, 0
  %v479 = vsel %vm438, %v408, 0
  %v482 = vsel %vm438, %v409, 0
  %v485 = vsel %vm438, %v410, 0
  %v488 = vsel %vm438, %v411, 0
  %v491 = vsel %vm438, %v412, 0
  %v494 = vsel %vm438, %v413, 0
  %v497 = vsel %vm438, %v414, 0
  %v500 = vsel %vm438, %v415, 0
  %v503 = vsel %vm438, %v416, 0
  %v506 = vsel %vm438, %v417, 0
  %v509 = vsel %vm438, %v418, 0
  %v512 = vsel %vm438, %v419, 0
  %v515 = vsel %vm438, %v420, 0
  %v518 = vsel %vm438, %v421, 0
  %v521 = vsel %vm438, %v422, 0
  %v524 = vsel %vm438, %v423, 0
  %v527 = vsel %vm438, %v424, 0
  %v530 = vsel %vm438, %v425, 0
  %v533 = vsel %vm438, %v426, 0
  %535 = vmatprep.subr.mxu0 0.0
  %536 = vmatpush1.msra.mxu0 %v427
  %537 = vmatprep.subr.mxu0 0.0
  %538 = vmatpush1.msra.mxu0 %v428
  %539 = vmatprep.subr.mxu0 0.0
  %540 = vmatpush1.msra.mxu0 %v429
  %541 = vmatprep.subr.mxu0 0.0
  %542 = vmatpush1.msra.mxu0 %v430
  %543 = vmatprep.subr.mxu0 0.0
  %544 = vmatpush1.msra.mxu0 0.0
  %545 = vmatprep.subr.mxu0 0.0
  %546 = vmatpush1.msra.mxu0 0.0
  %547 = vmatprep.subr.mxu0 0.0
  %548 = vmatpush1.msra.mxu0 0.0
  %549 = vmatprep.subr.mxu0 0.0
  %550 = vmatpush1.msra.mxu0 0.0
  %551 = vmatprep.subr.mxu0 0.0
  %552 = vmatpush1.msra.mxu0 0.0
  %553 = vmatprep.subr.mxu0 0.0
  %554 = vmatpush1.msra.mxu0 0.0
  %555 = vmatprep.subr.mxu0 0.0
  %556 = vmatpush1.msra.mxu0 0.0
  %557 = vmatprep.subr.mxu0 0.0
  %558 = vmatpush1.msra.mxu0 0.0
  %559 = vmatprep.subr.mxu0 0.0
  %560 = vmatpush1.msra.mxu0 0.0
  %561 = vmatprep.subr.mxu0 0.0
  %562 = vmatpush1.msra.mxu0 0.0
  %563 = vmatprep.subr.mxu0 0.0
  %564 = vmatpush1.msra.mxu0 0.0
  %565 = vmatprep.subr.mxu0 0.0
  %566 = vmatpush1.msra.mxu0 0.0
  %567 = vmatprep.subr.mxu0 0.0
  %568 = vmatpush1.msra.mxu0 0.0
  %569 = vmatprep.subr.mxu0 0.0
  %570 = vmatpush1.msra.mxu0 0.0
  %571 = vmatprep.subr.mxu0 0.0
  %572 = vmatpush1.msra.mxu0 0.0
  %573 = vmatprep.subr.mxu0 0.0
  %574 = vmatpush1.msra.mxu0 0.0
  %575 = vmatprep.subr.mxu0 0.0
  %576 = vmatpush1.msra.mxu0 0.0
  %577 = vmatprep.subr.mxu0 0.0
  %578 = vmatpush1.msra.mxu0 0.0
  %579 = vmatprep.subr.mxu0 0.0
  %580 = vmatpush1.msra.mxu0 0.0
  %581 = vmatprep.subr.mxu0 0.0
  %582 = vmatpush1.msra.mxu0 0.0
  %583 = vmatprep.subr.mxu0 0.0
  %584 = vmatpush1.msra.mxu0 0.0
  %585 = vmatprep.subr.mxu0 0.0
  %586 = vmatpush1.msra.mxu0 0.0
  %587 = vmatprep.subr.mxu0 0.0
  %588 = vmatpush1.msra.mxu0 0.0
  %589 = vmatprep.subr.mxu0 0.0
  %590 = vmatpush1.msra.mxu0 0.0
  %591 = vmatprep.subr.mxu0 0.0
  %592 = vmatpush1.msra.mxu0 0.0
  %593 = vmatprep.subr.mxu0 0.0
  %594 = vmatpush1.msra.mxu0 0.0
  %595 = vmatprep.subr.mxu0 0.0
  %596 = vmatpush1.msra.mxu0 0.0
  %597 = vmatprep.subr.mxu0 0.0
  %598 = vmatpush1.msra.mxu0 0.0
  %599 = vmatprep.mubr.f32.mxu0 0.0
  %600 = vmatmul.mubr.f32.gmra.mrb[0].mxu0 %v440
  %v601 = vpop.f32.mrb[0].mxu0
  %v602 = vadd.f32 %v436, %v601
  %v603 = vpop.f32.mrb[0].mxu0
  %604 = vmatprep.mubr.f32.mxu0 0.0
  %605 = vmatmul.mubr.f32.gmra.mrb[0].mxu0 %v443
  %v606 = vpop.f32.mrb[0].mxu0
  %v607 = vadd.f32 %v436, %v606
  %v608 = vpop.f32.mrb[0].mxu0
  %609 = vmatprep.mubr.f32.mxu0 0.0
  %610 = vmatmul.mubr.f32.gmra.mrb[0].mxu0 %v446
  %v611 = vpop.f32.mrb[0].mxu0
  %v612 = vadd.f32 %v436, %v611
  %v613 = vpop.f32.mrb[0].mxu0
  %614 = vmatprep.mubr.f32.mxu0 0.0
  %615 = vmatmul.mubr.f32.gmra.mrb[0].mxu0 %v449
  %v616 = vpop.f32.mrb[0].mxu0
  %v617 = vadd.f32 %v436, %v616
  %v618 = vpop.f32.mrb[0].mxu0
  %619 = vmatprep.mubr.f32.mxu0 0.0
  %620 = vmatmul.mubr.f32.gmra.mrb[0].mxu0 %v452
  %v621 = vpop.f32.mrb[0].mxu0
  %v622 = vadd.f32 %v436, %v621
  %v623 = vpop.f32.mrb[0].mxu0
  %624 = vmatprep.mubr.f32.mxu0 0.0
  %625 = vmatmul.mubr.f32.gmra.mrb[0].mxu0 %v455
  %v626 = vpop.f32.mrb[0].mxu0
  %v627 = vadd.f32 %v436, %v626
  %v628 = vpop.f32.mrb[0].mxu0
  %629 = vmatprep.mubr.f32.mxu0 0.0
  %630 = vmatmul.mubr.f32.gmra.mrb[0].mxu0 %v458
  %v631 = vpop.f32.mrb[0].mxu0
  %v632 = vadd.f32 %v436, %v631
  %v633 = vpop.f32.mrb[0].mxu0
  %634 = vmatprep.mubr.f32.mxu0 0.0
  %635 = vmatmul.mubr.f32.gmra.mrb[0].mxu0 %v461
  %v636 = vpop.f32.mrb[0].mxu0
  %v637 = vadd.f32 %v436, %v636
  %v638 = vpop.f32.mrb[0].mxu0
  %639 = vmatprep.mubr.f32.mxu0 0.0
  %640 = vmatmul.mubr.f32.gmra.mrb[0].mxu0 %v464
  %v641 = vpop.f32.mrb[0].mxu0
  %v642 = vadd.f32 %v436, %v641
  %v643 = vpop.f32.mrb[0].mxu0
  %644 = vmatprep.mubr.f32.mxu0 0.0
  %645 = vmatmul.mubr.f32.gmra.mrb[0].mxu0 %v467
  %v646 = vpop.f32.mrb[0].mxu0
  %v647 = vadd.f32 %v436, %v646
  %v648 = vpop.f32.mrb[0].mxu0
  %649 = vmatprep.mubr.f32.mxu0 0.0
  %650 = vmatmul.mubr.f32.gmra.mrb[0].mxu0 %v470
  %v651 = vpop.f32.mrb[0].mxu0
  %v652 = vadd.f32 %v436, %v651
  %v653 = vpop.f32.mrb[0].mxu0
  %654 = vmatprep.mubr.f32.mxu0 0.0
  %655 = vmatmul.mubr.f32.gmra.mrb[0].mxu0 %v473
  %v656 = vpop.f32.mrb[0].mxu0
  %v657 = vadd.f32 %v436, %v656
  %v658 = vpop.f32.mrb[0].mxu0
  %659 = vmatprep.mubr.f32.mxu0 0.0
  %660 = vmatmul.mubr.f32.gmra.mrb[0].mxu0 %v476
  %v661 = vpop.f32.mrb[0].mxu0
  %v662 = vadd.f32 %v436, %v661
  %v663 = vpop.f32.mrb[0].mxu0
  %664 = vmatprep.mubr.f32.mxu0 0.0
  %665 = vmatmul.mubr.f32.gmra.mrb[0].mxu0 %v479
  %v666 = vpop.f32.mrb[0].mxu0
  %v667 = vadd.f32 %v436, %v666
  %v668 = vpop.f32.mrb[0].mxu0
  %669 = vmatprep.mubr.f32.mxu0 0.0
  %670 = vmatmul.mubr.f32.gmra.mrb[0].mxu0 %v482
  %v671 = vpop.f32.mrb[0].mxu0
  %v672 = vadd.f32 %v436, %v671
  %v673 = vpop.f32.mrb[0].mxu0
  %674 = vmatprep.mubr.f32.mxu0 0.0
  %675 = vmatmul.mubr.f32.gmra.mrb[0].mxu0 %v485
  %v676 = vpop.f32.mrb[0].mxu0
  %v677 = vadd.f32 %v436, %v676
  %v678 = vpop.f32.mrb[0].mxu0
  %679 = vmatprep.mubr.f32.mxu0 0.0
  %680 = vmatmul.mubr.f32.gmra.mrb[0].mxu0 %v488
  %v681 = vpop.f32.mrb[0].mxu0
  %v682 = vadd.f32 %v436, %v681
  %v683 = vpop.f32.mrb[0].mxu0
  %684 = vmatprep.mubr.f32.mxu0 0.0
  %685 = vmatmul.mubr.f32.gmra.mrb[0].mxu0 %v491
  %v686 = vpop.f32.mrb[0].mxu0
  %v687 = vadd.f32 %v436, %v686
  %v688 = vpop.f32.mrb[0].mxu0
  %689 = vmatprep.mubr.f32.mxu0 0.0
  %690 = vmatmul.mubr.f32.gmra.mrb[0].mxu0 %v494
  %v691 = vpop.f32.mrb[0].mxu0
  %v692 = vadd.f32 %v436, %v691
  %v693 = vpop.f32.mrb[0].mxu0
  %694 = vmatprep.mubr.f32.mxu0 0.0
  %695 = vmatmul.mubr.f32.gmra.mrb[0].mxu0 %v497
  %v696 = vpop.f32.mrb[0].mxu0
  %v697 = vadd.f32 %v436, %v696
  %v698 = vpop.f32.mrb[0].mxu0
  %699 = vmatprep.mubr.f32.mxu0 0.0
  %700 = vmatmul.mubr.f32.gmra.mrb[0].mxu0 %v500
  %v701 = vpop.f32.mrb[0].mxu0
  %v702 = vadd.f32 %v436, %v701
  %v703 = vpop.f32.mrb[0].mxu0
  %704 = vmatprep.mubr.f32.mxu0 0.0
  %705 = vmatmul.mubr.f32.gmra.mrb[0].mxu0 %v503
  %v706 = vpop.f32.mrb[0].mxu0
  %v707 = vadd.f32 %v436, %v706
  %v708 = vpop.f32.mrb[0].mxu0
  %709 = vmatprep.mubr.f32.mxu0 0.0
  %710 = vmatmul.mubr.f32.gmra.mrb[0].mxu0 %v506
  %v711 = vpop.f32.mrb[0].mxu0
  %v712 = vadd.f32 %v436, %v711
  %v713 = vpop.f32.mrb[0].mxu0
  %714 = vmatprep.mubr.f32.mxu0 0.0
  %715 = vmatmul.mubr.f32.gmra.mrb[0].mxu0 %v509
  %v716 = vpop.f32.mrb[0].mxu0
  %v717 = vadd.f32 %v436, %v716
  %v718 = vpop.f32.mrb[0].mxu0
  %719 = vmatprep.mubr.f32.mxu0 0.0
  %720 = vmatmul.mubr.f32.gmra.mrb[0].mxu0 %v512
  %v721 = vpop.f32.mrb[0].mxu0
  %v722 = vadd.f32 %v436, %v721
  %v723 = vpop.f32.mrb[0].mxu0
  %724 = vmatprep.mubr.f32.mxu0 0.0
  %725 = vmatmul.mubr.f32.gmra.mrb[0].mxu0 %v515
  %v726 = vpop.f32.mrb[0].mxu0
  %v727 = vadd.f32 %v436, %v726
  %v728 = vpop.f32.mrb[0].mxu0
  %729 = vmatprep.mubr.f32.mxu0 0.0
  %730 = vmatmul.mubr.f32.gmra.mrb[0].mxu0 %v518
  %v731 = vpop.f32.mrb[0].mxu0
  %v732 = vadd.f32 %v436, %v731
  %v733 = vpop.f32.mrb[0].mxu0
  %734 = vmatprep.mubr.f32.mxu0 0.0
  %735 = vmatmul.mubr.f32.gmra.mrb[0].mxu0 %v521
  %v736 = vpop.f32.mrb[0].mxu0
  %v737 = vadd.f32 %v436, %v736
  %v738 = vpop.f32.mrb[0].mxu0
  %739 = vmatprep.mubr.f32.mxu0 0.0
  %740 = vmatmul.mubr.f32.gmra.mrb[0].mxu0 %v524
  %v741 = vpop.f32.mrb[0].mxu0
  %v742 = vadd.f32 %v436, %v741
  %v743 = vpop.f32.mrb[0].mxu0
  %744 = vmatprep.mubr.f32.mxu0 0.0
  %745 = vmatmul.mubr.f32.gmra.mrb[0].mxu0 %v527
  %v746 = vpop.f32.mrb[0].mxu0
  %v747 = vadd.f32 %v436, %v746
  %v748 = vpop.f32.mrb[0].mxu0
  %749 = vmatprep.mubr.f32.mxu0 0.0
  %750 = vmatmul.mubr.f32.gmra.mrb[0].mxu0 %v530
  %v751 = vpop.f32.mrb[0].mxu0
  %v752 = vadd.f32 %v436, %v751
  %v753 = vpop.f32.mrb[0].mxu0
  %754 = vmatprep.mubr.f32.mxu0 0.0
  %755 = vmatmul.mubr.f32.gmra.mrb[0].mxu0 %v533
  %v756 = vpop.f32.mrb[0].mxu0
  %v757 = vadd.f32 %v436, %v756
  %v758 = vpop.f32.mrb[0].mxu0
  %759 = vdwg.mxu0
  %v760 = vmax.f32 %v602, 0.0
  %v761 = vmax.f32 %v607, 0.0
  %v762 = vmax.f32 %v612, 0.0
  %v763 = vmax.f32 %v617, 0.0
  %v764 = vmax.f32 %v622, 0.0
  %v765 = vmax.f32 %v627, 0.0
  %v766 = vmax.f32 %v632, 0.0
  %v767 = vmax.f32 %v637, 0.0
  %v768 = vmax.f32 %v642, 0.0
  %v769 = vmax.f32 %v647, 0.0
  %v770 = vmax.f32 %v652, 0.0
  %v771 = vmax.f32 %v657, 0.0
  %v772 = vmax.f32 %v662, 0.0
  %v773 = vmax.f32 %v667, 0.0
  %v774 = vmax.f32 %v672, 0.0
  %v775 = vmax.f32 %v677, 0.0
  %v776 = vmax.f32 %v682, 0.0
  %v777 = vmax.f32 %v687, 0.0
  %v778 = vmax.f32 %v692, 0.0
  %v779 = vmax.f32 %v697, 0.0
  %v780 = vmax.f32 %v702, 0.0
  %v781 = vmax.f32 %v707, 0.0
  %v782 = vmax.f32 %v712, 0.0
  %v783 = vmax.f32 %v717, 0.0
  %v784 = vmax.f32 %v722, 0.0
  %v785 = vmax.f32 %v727, 0.0
  %v786 = vmax.f32 %v732, 0.0
  %v787 = vmax.f32 %v737, 0.0
  %v788 = vmax.f32 %v742, 0.0
  %v789 = vmax.f32 %v747, 0.0
  %v790 = vmax.f32 %v752, 0.0
  %v791 = vmax.f32 %v757, 0.0
  %v792 = vld [vmem:[%s5] sm:$0xff]
  %v793 = vld [vmem:[%s5 + $0x8] sm:$0xff]
  %v794 = vld [vmem:[%s6] sm:$0x1]
  %v796 = vlaneseq
  %v797 = vshrl.u32 %v796, 7
  %v798 = vsub.s32 0, %v797
  %v799 = vrot.slane %v794, %v798
  %v802 = vsel %vm73, %v760, 0
  %v805 = vsel %vm73, %v761, 0
  %v808 = vsel %vm73, %v762, 0
  %v811 = vsel %vm73, %v763, 0
  %v814 = vsel %vm73, %v764, 0
  %v817 = vsel %vm73, %v765, 0
  %v820 = vsel %vm73, %v766, 0
  %v823 = vsel %vm73, %v767, 0
  %v826 = vsel %vm73, %v768, 0
  %v829 = vsel %vm73, %v769, 0
  %v832 = vsel %vm73, %v770, 0
  %v835 = vsel %vm73, %v771, 0
  %v838 = vsel %vm73, %v772, 0
  %v841 = vsel %vm73, %v773, 0
  %v844 = vsel %vm73, %v774, 0
  %v847 = vsel %vm73, %v775, 0
  %v850 = vsel %vm73, %v776, 0
  %v853 = vsel %vm73, %v777, 0
  %v856 = vsel %vm73, %v778, 0
  %v859 = vsel %vm73, %v779, 0
  %v862 = vsel %vm73, %v780, 0
  %v865 = vsel %vm73, %v781, 0
  %v868 = vsel %vm73, %v782, 0
  %v871 = vsel %vm73, %v783, 0
  %v874 = vsel %vm73, %v784, 0
  %v877 = vsel %vm73, %v785, 0
  %v880 = vsel %vm73, %v786, 0
  %v883 = vsel %vm73, %v787, 0
  %v886 = vsel %vm73, %v788, 0
  %v889 = vsel %vm73, %v789, 0
  %v892 = vsel %vm73, %v790, 0
  %v895 = vsel %vm73, %v791, 0
  %897 = vmatprep.subr.mxu0 0.0
  %898 = vmatpush1.msra.mxu0 %v792
  %899 = vmatprep.subr.mxu0 0.0
  %900 = vmatpush1.msra.mxu0 %v793
  %901 = vmatprep.subr.mxu0 0.0
  %902 = vmatpush1.msra.mxu0 0.0
  %903 = vmatprep.subr.mxu0 0.0
  %904 = vmatpush1.msra.mxu0 0.0
  %905 = vmatprep.subr.mxu0 0.0
  %906 = vmatpush1.msra.mxu0 0.0
  %907 = vmatprep.subr.mxu0 0.0
  %908 = vmatpush1.msra.mxu0 0.0
  %909 = vmatprep.subr.mxu0 0.0
  %910 = vmatpush1.msra.mxu0 0.0
  %911 = vmatprep.subr.mxu0 0.0
  %912 = vmatpush1.msra.mxu0 0.0
  %913 = vmatprep.subr.mxu0 0.0
  %914 = vmatpush1.msra.mxu0 0.0
  %915 = vmatprep.subr.mxu0 0.0
  %916 = vmatpush1.msra.mxu0 0.0
  %917 = vmatprep.subr.mxu0 0.0
  %918 = vmatpush1.msra.mxu0 0.0
  %919 = vmatprep.subr.mxu0 0.0
  %920 = vmatpush1.msra.mxu0 0.0
  %921 = vmatprep.subr.mxu0 0.0
  %922 = vmatpush1.msra.mxu0 0.0
  %923 = vmatprep.subr.mxu0 0.0
  %924 = vmatpush1.msra.mxu0 0.0
  %925 = vmatprep.subr.mxu0 0.0
  %926 = vmatpush1.msra.mxu0 0.0
  %927 = vmatprep.subr.mxu0 0.0
  %928 = vmatpush1.msra.mxu0 0.0
  %929 = vmatprep.subr.mxu0 0.0
  %930 = vmatpush1.msra.mxu0 0.0
  %931 = vmatprep.subr.mxu0 0.0
  %932 = vmatpush1.msra.mxu0 0.0
  %933 = vmatprep.subr.mxu0 0.0
  %934 = vmatpush1.msra.mxu0 0.0
  %935 = vmatprep.subr.mxu0 0.0
  %936 = vmatpush1.msra.mxu0 0.0
  %937 = vmatprep.subr.mxu0 0.0
  %938 = vmatpush1.msra.mxu0 0.0
  %939 = vmatprep.subr.mxu0 0.0
  %940 = vmatpush1.msra.mxu0 0.0
  %941 = vmatprep.subr.mxu0 0.0
  %942 = vmatpush1.msra.mxu0 0.0
  %943 = vmatprep.subr.mxu0 0.0
  %944 = vmatpush1.msra.mxu0 0.0
  %945 = vmatprep.subr.mxu0 0.0
  %946 = vmatpush1.msra.mxu0 0.0
  %947 = vmatprep.subr.mxu0 0.0
  %948 = vmatpush1.msra.mxu0 0.0
  %949 = vmatprep.subr.mxu0 0.0
  %950 = vmatpush1.msra.mxu0 0.0
  %951 = vmatprep.subr.mxu0 0.0
  %952 = vmatpush1.msra.mxu0 0.0
  %953 = vmatprep.subr.mxu0 0.0
  %954 = vmatpush1.msra.mxu0 0.0
  %955 = vmatprep.subr.mxu0 0.0
  %956 = vmatpush1.msra.mxu0 0.0
  %957 = vmatprep.subr.mxu0 0.0
  %958 = vmatpush1.msra.mxu0 0.0
  %959 = vmatprep.subr.mxu0 0.0
  %960 = vmatpush1.msra.mxu0 0.0
  %961 = vmatprep.mubr.f32.mxu0 0.0
  %962 = vmatmul.mubr.f32.gmra.mrb[0].mxu0 %v802
  %v963 = vpop.f32.mrb[0].mxu0
  %v964 = vadd.f32 %v799, %v963
  %v965 = vpop.f32.mrb[0].mxu0
  %966 = vmatprep.mubr.f32.mxu0 0.0
  %967 = vmatmul.mubr.f32.gmra.mrb[0].mxu0 %v805
  %v968 = vpop.f32.mrb[0].mxu0
  %v969 = vadd.f32 %v799, %v968
  %v970 = vpop.f32.mrb[0].mxu0
  %971 = vmatprep.mubr.f32.mxu0 0.0
  %972 = vmatmul.mubr.f32.gmra.mrb[0].mxu0 %v808
  %v973 = vpop.f32.mrb[0].mxu0
  %v974 = vadd.f32 %v799, %v973
  %v975 = vpop.f32.mrb[0].mxu0
  %976 = vmatprep.mubr.f32.mxu0 0.0
  %977 = vmatmul.mubr.f32.gmra.mrb[0].mxu0 %v811
  %v978 = vpop.f32.mrb[0].mxu0
  %v979 = vadd.f32 %v799, %v978
  %v980 = vpop.f32.mrb[0].mxu0
  %981 = vmatprep.mubr.f32.mxu0 0.0
  %982 = vmatmul.mubr.f32.gmra.mrb[0].mxu0 %v814
  %v983 = vpop.f32.mrb[0].mxu0
  %v984 = vadd.f32 %v799, %v983
  %v985 = vpop.f32.mrb[0].mxu0
  %986 = vmatprep.mubr.f32.mxu0 0.0
  %987 = vmatmul.mubr.f32.gmra.mrb[0].mxu0 %v817
  %v988 = vpop.f32.mrb[0].mxu0
  %v989 = vadd.f32 %v799, %v988
  %v990 = vpop.f32.mrb[0].mxu0
  %991 = vmatprep.mubr.f32.mxu0 0.0
  %992 = vmatmul.mubr.f32.gmra.mrb[0].mxu0 %v820
  %v993 = vpop.f32.mrb[0].mxu0
  %v994 = vadd.f32 %v799, %v993
  %v995 = vpop.f32.mrb[0].mxu0
  %996 = vmatprep.mubr.f32.mxu0 0.0
  %997 = vmatmul.mubr.f32.gmra.mrb[0].mxu0 %v823
  %v998 = vpop.f32.mrb[0].mxu0
  %v999 = vadd.f32 %v799, %v998
  %v1000 = vpop.f32.mrb[0].mxu0
  %1001 = vmatprep.mubr.f32.mxu0 0.0
  %1002 = vmatmul.mubr.f32.gmra.mrb[0].mxu0 %v826
  %v1003 = vpop.f32.mrb[0].mxu0
  %v1004 = vadd.f32 %v799, %v1003
  %v1005 = vpop.f32.mrb[0].mxu0
  %1006 = vmatprep.mubr.f32.mxu0 0.0
  %1007 = vmatmul.mubr.f32.gmra.mrb[0].mxu0 %v829
  %v1008 = vpop.f32.mrb[0].mxu0
  %v1009 = vadd.f32 %v799, %v1008
  %v1010 = vpop.f32.mrb[0].mxu0
  %1011 = vmatprep.mubr.f32.mxu0 0.0
  %1012 = vmatmul.mubr.f32.gmra.mrb[0].mxu0 %v832
  %v1013 = vpop.f32.mrb[0].mxu0
  %v1014 = vadd.f32 %v799, %v1013
  %v1015 = vpop.f32.mrb[0].mxu0
  %1016 = vmatprep.mubr.f32.mxu0 0.0
  %1017 = vmatmul.mubr.f32.gmra.mrb[0].mxu0 %v835
  %v1018 = vpop.f32.mrb[0].mxu0
  %v1019 = vadd.f32 %v799, %v1018
  %v1020 = vpop.f32.mrb[0].mxu0
  %1021 = vmatprep.mubr.f32.mxu0 0.0
  %1022 = vmatmul.mubr.f32.gmra.mrb[0].mxu0 %v838
  %v1023 = vpop.f32.mrb[0].mxu0
  %v1024 = vadd.f32 %v799, %v1023
  %v1025 = vpop.f32.mrb[0].mxu0
  %1026 = vmatprep.mubr.f32.mxu0 0.0
  %1027 = vmatmul.mubr.f32.gmra.mrb[0].mxu0 %v841
  %v1028 = vpop.f32.mrb[0].mxu0
  %v1029 = vadd.f32 %v799, %v1028
  %v1030 = vpop.f32.mrb[0].mxu0
  %1031 = vmatprep.mubr.f32.mxu0 0.0
  %1032 = vmatmul.mubr.f32.gmra.mrb[0].mxu0 %v844
  %v1033 = vpop.f32.mrb[0].mxu0
  %v1034 = vadd.f32 %v799, %v1033
  %v1035 = vpop.f32.mrb[0].mxu0
  %1036 = vmatprep.mubr.f32.mxu0 0.0
  %1037 = vmatmul.mubr.f32.gmra.mrb[0].mxu0 %v847
  %v1038 = vpop.f32.mrb[0].mxu0
  %v1039 = vadd.f32 %v799, %v1038
  %v1040 = vpop.f32.mrb[0].mxu0
  %1041 = vmatprep.mubr.f32.mxu0 0.0
  %1042 = vmatmul.mubr.f32.gmra.mrb[0].mxu0 %v850
  %v1043 = vpop.f32.mrb[0].mxu0
  %v1044 = vadd.f32 %v799, %v1043
  %v1045 = vpop.f32.mrb[0].mxu0
  %1046 = vmatprep.mubr.f32.mxu0 0.0
  %1047 = vmatmul.mubr.f32.gmra.mrb[0].mxu0 %v853
  %v1048 = vpop.f32.mrb[0].mxu0
  %v1049 = vadd.f32 %v799, %v1048
  %v1050 = vpop.f32.mrb[0].mxu0
  %1051 = vmatprep.mubr.f32.mxu0 0.0
  %1052 = vmatmul.mubr.f32.gmra.mrb[0].mxu0 %v856
  %v1053 = vpop.f32.mrb[0].mxu0
  %v1054 = vadd.f32 %v799, %v1053
  %v1055 = vpop.f32.mrb[0].mxu0
  %1056 = vmatprep.mubr.f32.mxu0 0.0
  %1057 = vmatmul.mubr.f32.gmra.mrb[0].mxu0 %v859
  %v1058 = vpop.f32.mrb[0].mxu0
  %v1059 = vadd.f32 %v799, %v1058
  %v1060 = vpop.f32.mrb[0].mxu0
  %1061 = vmatprep.mubr.f32.mxu0 0.0
  %1062 = vmatmul.mubr.f32.gmra.mrb[0].mxu0 %v862
  %v1063 = vpop.f32.mrb[0].mxu0
  %v1064 = vadd.f32 %v799, %v1063
  %v1065 = vpop.f32.mrb[0].mxu0
  %1066 = vmatprep.mubr.f32.mxu0 0.0
  %1067 = vmatmul.mubr.f32.gmra.mrb[0].mxu0 %v865
  %v1068 = vpop.f32.mrb[0].mxu0
  %v1069 = vadd.f32 %v799, %v1068
  %v1070 = vpop.f32.mrb[0].mxu0
  %1071 = vmatprep.mubr.f32.mxu0 0.0
  %1072 = vmatmul.mubr.f32.gmra.mrb[0].mxu0 %v868
  %v1073 = vpop.f32.mrb[0].mxu0
  %v1074 = vadd.f32 %v799, %v1073
  %v1075 = vpop.f32.mrb[0].mxu0
  %1076 = vmatprep.mubr.f32.mxu0 0.0
  %1077 = vmatmul.mubr.f32.gmra.mrb[0].mxu0 %v871
  %v1078 = vpop.f32.mrb[0].mxu0
  %v1079 = vadd.f32 %v799, %v1078
  %v1080 = vpop.f32.mrb[0].mxu0
  %1081 = vmatprep.mubr.f32.mxu0 0.0
  %1082 = vmatmul.mubr.f32.gmra.mrb[0].mxu0 %v874
  %v1083 = vpop.f32.mrb[0].mxu0
  %v1084 = vadd.f32 %v799, %v1083
  %v1085 = vpop.f32.mrb[0].mxu0
  %1086 = vmatprep.mubr.f32.mxu0 0.0
  %1087 = vmatmul.mubr.f32.gmra.mrb[0].mxu0 %v877
  %v1088 = vpop.f32.mrb[0].mxu0
  %v1089 = vadd.f32 %v799, %v1088
  %v1090 = vpop.f32.mrb[0].mxu0
  %1091 = vmatprep.mubr.f32.mxu0 0.0
  %1092 = vmatmul.mubr.f32.gmra.mrb[0].mxu0 %v880
  %v1093 = vpop.f32.mrb[0].mxu0
  %v1094 = vadd.f32 %v799, %v1093
  %v1095 = vpop.f32.mrb[0].mxu0
  %1096 = vmatprep.mubr.f32.mxu0 0.0
  %1097 = vmatmul.mubr.f32.gmra.mrb[0].mxu0 %v883
  %v1098 = vpop.f32.mrb[0].mxu0
  %v1099 = vadd.f32 %v799, %v1098
  %v1100 = vpop.f32.mrb[0].mxu0
  %1101 = vmatprep.mubr.f32.mxu0 0.0
  %1102 = vmatmul.mubr.f32.gmra.mrb[0].mxu0 %v886
  %v1103 = vpop.f32.mrb[0].mxu0
  %v1104 = vadd.f32 %v799, %v1103
  %v1105 = vpop.f32.mrb[0].mxu0
  %1106 = vmatprep.mubr.f32.mxu0 0.0
  %1107 = vmatmul.mubr.f32.gmra.mrb[0].mxu0 %v889
  %v1108 = vpop.f32.mrb[0].mxu0
  %v1109 = vadd.f32 %v799, %v1108
  %v1110 = vpop.f32.mrb[0].mxu0
  %1111 = vmatprep.mubr.f32.mxu0 0.0
  %1112 = vmatmul.mubr.f32.gmra.mrb[0].mxu0 %v892
  %v1113 = vpop.f32.mrb[0].mxu0
  %v1114 = vadd.f32 %v799, %v1113
  %v1115 = vpop.f32.mrb[0].mxu0
  %1116 = vmatprep.mubr.f32.mxu0 0.0
  %1117 = vmatmul.mubr.f32.gmra.mrb[0].mxu0 %v895
  %v1118 = vpop.f32.mrb[0].mxu0
  %v1119 = vadd.f32 %v799, %v1118
  %v1120 = vpop.f32.mrb[0].mxu0
  %1121 = vdwg.mxu0
  %v1122 = vmax.f32 %v964, 0.0
  %v1123 = vmax.f32 %v969, 0.0
  %v1124 = vmax.f32 %v974, 0.0
  %v1125 = vmax.f32 %v979, 0.0
  %v1126 = vmax.f32 %v984, 0.0
  %v1127 = vmax.f32 %v989, 0.0
  %v1128 = vmax.f32 %v994, 0.0
  %v1129 = vmax.f32 %v999, 0.0
  %v1130 = vmax.f32 %v1004, 0.0
  %v1131 = vmax.f32 %v1009, 0.0
  %v1132 = vmax.f32 %v1014, 0.0
  %v1133 = vmax.f32 %v1019, 0.0
  %v1134 = vmax.f32 %v1024, 0.0
  %v1135 = vmax.f32 %v1029, 0.0
  %v1136 = vmax.f32 %v1034, 0.0
  %v1137 = vmax.f32 %v1039, 0.0
  %v1138 = vmax.f32 %v1044, 0.0
  %v1139 = vmax.f32 %v1049, 0.0
  %v1140 = vmax.f32 %v1054, 0.0
  %v1141 = vmax.f32 %v1059, 0.0
  %v1142 = vmax.f32 %v1064, 0.0
  %v1143 = vmax.f32 %v1069, 0.0
  %v1144 = vmax.f32 %v1074, 0.0
  %v1145 = vmax.f32 %v1079, 0.0
  %v1146 = vmax.f32 %v1084, 0.0
  %v1147 = vmax.f32 %v1089, 0.0
  %v1148 = vmax.f32 %v1094, 0.0
  %v1149 = vmax.f32 %v1099, 0.0
  %v1150 = vmax.f32 %v1104, 0.0
  %v1151 = vmax.f32 %v1109, 0.0
  %v1152 = vmax.f32 %v1114, 0.0
  %v1153 = vmax.f32 %v1119, 0.0
  %v1154 = vld [vmem:[%s7] sm:$0xff]
  %v1155 = vld [vmem:[%s8] sm:$0x1]
  %v1157 = vlaneseq
  %v1158 = vshrl.u32 %v1157, 7
  %v1159 = vsub.s32 0, %v1158
  %v1160 = vrot.slane %v1155, %v1159
  %vm1162 = vcmask 64512
  %v1164 = vsel %vm1162, %v1122, 0
  %v1167 = vsel %vm1162, %v1123, 0
  %v1170 = vsel %vm1162, %v1124, 0
  %v1173 = vsel %vm1162, %v1125, 0
  %v1176 = vsel %vm1162, %v1126, 0
  %v1179 = vsel %vm1162, %v1127, 0
  %v1182 = vsel %vm1162, %v1128, 0
  %v1185 = vsel %vm1162, %v1129, 0
  %v1188 = vsel %vm1162, %v1130, 0
  %v1191 = vsel %vm1162, %v1131, 0
  %v1194 = vsel %vm1162, %v1132, 0
  %v1197 = vsel %vm1162, %v1133, 0
  %v1200 = vsel %vm1162, %v1134, 0
  %v1203 = vsel %vm1162, %v1135, 0
  %v1206 = vsel %vm1162, %v1136, 0
  %v1209 = vsel %vm1162, %v1137, 0
  %v1212 = vsel %vm1162, %v1138, 0
  %v1215 = vsel %vm1162, %v1139, 0
  %v1218 = vsel %vm1162, %v1140, 0
  %v1221 = vsel %vm1162, %v1141, 0
  %v1224 = vsel %vm1162, %v1142, 0
  %v1227 = vsel %vm1162, %v1143, 0
  %v1230 = vsel %vm1162, %v1144, 0
  %v1233 = vsel %vm1162, %v1145, 0
  %v1236 = vsel %vm1162, %v1146, 0
  %v1239 = vsel %vm1162, %v1147, 0
  %v1242 = vsel %vm1162, %v1148, 0
  %v1245 = vsel %vm1162, %v1149, 0
  %v1248 = vsel %vm1162, %v1150, 0
  %v1251 = vsel %vm1162, %v1151, 0
  %v1254 = vsel %vm1162, %v1152, 0
  %v1257 = vsel %vm1162, %v1153, 0
  %1259 = vmatprep.subr.mxu0 0.0
  %1260 = vmatpush1.msra.mxu0 %v1154
  %1261 = vmatprep.subr.mxu0 0.0
  %1262 = vmatpush1.msra.mxu0 0.0
  %1263 = vmatprep.subr.mxu0 0.0
  %1264 = vmatpush1.msra.mxu0 0.0
  %1265 = vmatprep.subr.mxu0 0.0
  %1266 = vmatpush1.msra.mxu0 0.0
  %1267 = vmatprep.subr.mxu0 0.0
  %1268 = vmatpush1.msra.mxu0 0.0
  %1269 = vmatprep.subr.mxu0 0.0
  %1270 = vmatpush1.msra.mxu0 0.0
  %1271 = vmatprep.subr.mxu0 0.0
  %1272 = vmatpush1.msra.mxu0 0.0
  %1273 = vmatprep.subr.mxu0 0.0
  %1274 = vmatpush1.msra.mxu0 0.0
  %1275 = vmatprep.subr.mxu0 0.0
  %1276 = vmatpush1.msra.mxu0 0.0
  %1277 = vmatprep.subr.mxu0 0.0
  %1278 = vmatpush1.msra.mxu0 0.0
  %1279 = vmatprep.subr.mxu0 0.0
  %1280 = vmatpush1.msra.mxu0 0.0
  %1281 = vmatprep.subr.mxu0 0.0
  %1282 = vmatpush1.msra.mxu0 0.0
  %1283 = vmatprep.subr.mxu0 0.0
  %1284 = vmatpush1.msra.mxu0 0.0
  %1285 = vmatprep.subr.mxu0 0.0
  %1286 = vmatpush1.msra.mxu0 0.0
  %1287 = vmatprep.subr.mxu0 0.0
  %1288 = vmatpush1.msra.mxu0 0.0
  %1289 = vmatprep.subr.mxu0 0.0
  %1290 = vmatpush1.msra.mxu0 0.0
  %1291 = vmatprep.subr.mxu0 0.0
  %1292 = vmatpush1.msra.mxu0 0.0
  %1293 = vmatprep.subr.mxu0 0.0
  %1294 = vmatpush1.msra.mxu0 0.0
  %1295 = vmatprep.subr.mxu0 0.0
  %1296 = vmatpush1.msra.mxu0 0.0
  %1297 = vmatprep.subr.mxu0 0.0
  %1298 = vmatpush1.msra.mxu0 0.0
  %1299 = vmatprep.subr.mxu0 0.0
  %1300 = vmatpush1.msra.mxu0 0.0
  %1301 = vmatprep.subr.mxu0 0.0
  %1302 = vmatpush1.msra.mxu0 0.0
  %1303 = vmatprep.subr.mxu0 0.0
  %1304 = vmatpush1.msra.mxu0 0.0
  %1305 = vmatprep.subr.mxu0 0.0
  %1306 = vmatpush1.msra.mxu0 0.0
  %1307 = vmatprep.subr.mxu0 0.0
  %1308 = vmatpush1.msra.mxu0 0.0
  %1309 = vmatprep.subr.mxu0 0.0
  %1310 = vmatpush1.msra.mxu0 0.0
  %1311 = vmatprep.subr.mxu0 0.0
  %1312 = vmatpush1.msra.mxu0 0.0
  %1313 = vmatprep.subr.mxu0 0.0
  %1314 = vmatpush1.msra.mxu0 0.0
  %1315 = vmatprep.subr.mxu0 0.0
  %1316 = vmatpush1.msra.mxu0 0.0
  %1317 = vmatprep.subr.mxu0 0.0
  %1318 = vmatpush1.msra.mxu0 0.0
  %1319 = vmatprep.subr.mxu0 0.0
  %1320 = vmatpush1.msra.mxu0 0.0
  %1321 = vmatprep.subr.mxu0 0.0
  %1322 = vmatpush1.msra.mxu0 0.0
  %1323 = vmatprep.mubr.f32.mxu0 0.0
  %1324 = vmatmul.mubr.f32.gmra.mrb[0].mxu0 %v1164
  %v1325 = vpop.f32.mrb[0].mxu0
  %v1326 = vadd.f32 %v1160, %v1325
  %v1327 = vpop.f32.mrb[0].mxu0
  %1328 = vmatprep.mubr.f32.mxu0 0.0
  %1329 = vmatmul.mubr.f32.gmra.mrb[0].mxu0 %v1167
  %v1330 = vpop.f32.mrb[0].mxu0
  %v1331 = vadd.f32 %v1160, %v1330
  %v1332 = vpop.f32.mrb[0].mxu0
  %1333 = vmatprep.mubr.f32.mxu0 0.0
  %1334 = vmatmul.mubr.f32.gmra.mrb[0].mxu0 %v1170
  %v1335 = vpop.f32.mrb[0].mxu0
  %v1336 = vadd.f32 %v1160, %v1335
  %v1337 = vpop.f32.mrb[0].mxu0
  %1338 = vmatprep.mubr.f32.mxu0 0.0
  %1339 = vmatmul.mubr.f32.gmra.mrb[0].mxu0 %v1173
  %v1340 = vpop.f32.mrb[0].mxu0
  %v1341 = vadd.f32 %v1160, %v1340
  %v1342 = vpop.f32.mrb[0].mxu0
  %1343 = vmatprep.mubr.f32.mxu0 0.0
  %1344 = vmatmul.mubr.f32.gmra.mrb[0].mxu0 %v1176
  %v1345 = vpop.f32.mrb[0].mxu0
  %v1346 = vadd.f32 %v1160, %v1345
  %v1347 = vpop.f32.mrb[0].mxu0
  %1348 = vmatprep.mubr.f32.mxu0 0.0
  %1349 = vmatmul.mubr.f32.gmra.mrb[0].mxu0 %v1179
  %v1350 = vpop.f32.mrb[0].mxu0
  %v1351 = vadd.f32 %v1160, %v1350
  %v1352 = vpop.f32.mrb[0].mxu0
  %1353 = vmatprep.mubr.f32.mxu0 0.0
  %1354 = vmatmul.mubr.f32.gmra.mrb[0].mxu0 %v1182
  %v1355 = vpop.f32.mrb[0].mxu0
  %v1356 = vadd.f32 %v1160, %v1355
  %v1357 = vpop.f32.mrb[0].mxu0
  %1358 = vmatprep.mubr.f32.mxu0 0.0
  %1359 = vmatmul.mubr.f32.gmra.mrb[0].mxu0 %v1185
  %v1360 = vpop.f32.mrb[0].mxu0
  %v1361 = vadd.f32 %v1160, %v1360
  %v1362 = vpop.f32.mrb[0].mxu0
  %1363 = vmatprep.mubr.f32.mxu0 0.0
  %1364 = vmatmul.mubr.f32.gmra.mrb[0].mxu0 %v1188
  %v1365 = vpop.f32.mrb[0].mxu0
  %v1366 = vadd.f32 %v1160, %v1365
  %v1367 = vpop.f32.mrb[0].mxu0
  %1368 = vmatprep.mubr.f32.mxu0 0.0
  %1369 = vmatmul.mubr.f32.gmra.mrb[0].mxu0 %v1191
  %v1370 = vpop.f32.mrb[0].mxu0
  %v1371 = vadd.f32 %v1160, %v1370
  %v1372 = vpop.f32.mrb[0].mxu0
  %1373 = vmatprep.mubr.f32.mxu0 0.0
  %1374 = vmatmul.mubr.f32.gmra.mrb[0].mxu0 %v1194
  %v1375 = vpop.f32.mrb[0].mxu0
  %v1376 = vadd.f32 %v1160, %v1375
  %v1377 = vpop.f32.mrb[0].mxu0
  %1378 = vmatprep.mubr.f32.mxu0 0.0
  %1379 = vmatmul.mubr.f32.gmra.mrb[0].mxu0 %v1197
  %v1380 = vpop.f32.mrb[0].mxu0
  %v1381 = vadd.f32 %v1160, %v1380
  %v1382 = vpop.f32.mrb[0].mxu0
  %1383 = vmatprep.mubr.f32.mxu0 0.0
  %1384 = vmatmul.mubr.f32.gmra.mrb[0].mxu0 %v1200
  %v1385 = vpop.f32.mrb[0].mxu0
  %v1386 = vadd.f32 %v1160, %v1385
  %v1387 = vpop.f32.mrb[0].mxu0
  %1388 = vmatprep.mubr.f32.mxu0 0.0
  %1389 = vmatmul.mubr.f32.gmra.mrb[0].mxu0 %v1203
  %v1390 = vpop.f32.mrb[0].mxu0
  %v1391 = vadd.f32 %v1160, %v1390
  %v1392 = vpop.f32.mrb[0].mxu0
  %1393 = vmatprep.mubr.f32.mxu0 0.0
  %1394 = vmatmul.mubr.f32.gmra.mrb[0].mxu0 %v1206
  %v1395 = vpop.f32.mrb[0].mxu0
  %v1396 = vadd.f32 %v1160, %v1395
  %v1397 = vpop.f32.mrb[0].mxu0
  %1398 = vmatprep.mubr.f32.mxu0 0.0
  %1399 = vmatmul.mubr.f32.gmra.mrb[0].mxu0 %v1209
  %v1400 = vpop.f32.mrb[0].mxu0
  %v1401 = vadd.f32 %v1160, %v1400
  %v1402 = vpop.f32.mrb[0].mxu0
  %1403 = vmatprep.mubr.f32.mxu0 0.0
  %1404 = vmatmul.mubr.f32.gmra.mrb[0].mxu0 %v1212
  %v1405 = vpop.f32.mrb[0].mxu0
  %v1406 = vadd.f32 %v1160, %v1405
  %v1407 = vpop.f32.mrb[0].mxu0
  %1408 = vmatprep.mubr.f32.mxu0 0.0
  %1409 = vmatmul.mubr.f32.gmra.mrb[0].mxu0 %v1215
  %v1410 = vpop.f32.mrb[0].mxu0
  %v1411 = vadd.f32 %v1160, %v1410
  %v1412 = vpop.f32.mrb[0].mxu0
  %1413 = vmatprep.mubr.f32.mxu0 0.0
  %1414 = vmatmul.mubr.f32.gmra.mrb[0].mxu0 %v1218
  %v1415 = vpop.f32.mrb[0].mxu0
  %v1416 = vadd.f32 %v1160, %v1415
  %v1417 = vpop.f32.mrb[0].mxu0
  %1418 = vmatprep.mubr.f32.mxu0 0.0
  %1419 = vmatmul.mubr.f32.gmra.mrb[0].mxu0 %v1221
  %v1420 = vpop.f32.mrb[0].mxu0
  %v1421 = vadd.f32 %v1160, %v1420
  %v1422 = vpop.f32.mrb[0].mxu0
  %1423 = vmatprep.mubr.f32.mxu0 0.0
  %1424 = vmatmul.mubr.f32.gmra.mrb[0].mxu0 %v1224
  %v1425 = vpop.f32.mrb[0].mxu0
  %v1426 = vadd.f32 %v1160, %v1425
  %v1427 = vpop.f32.mrb[0].mxu0
  %1428 = vmatprep.mubr.f32.mxu0 0.0
  %1429 = vmatmul.mubr.f32.gmra.mrb[0].mxu0 %v1227
  %v1430 = vpop.f32.mrb[0].mxu0
  %v1431 = vadd.f32 %v1160, %v1430
  %v1432 = vpop.f32.mrb[0].mxu0
  %1433 = vmatprep.mubr.f32.mxu0 0.0
  %1434 = vmatmul.mubr.f32.gmra.mrb[0].mxu0 %v1230
  %v1435 = vpop.f32.mrb[0].mxu0
  %v1436 = vadd.f32 %v1160, %v1435
  %v1437 = vpop.f32.mrb[0].mxu0
  %1438 = vmatprep.mubr.f32.mxu0 0.0
  %1439 = vmatmul.mubr.f32.gmra.mrb[0].mxu0 %v1233
  %v1440 = vpop.f32.mrb[0].mxu0
  %v1441 = vadd.f32 %v1160, %v1440
  %v1442 = vpop.f32.mrb[0].mxu0
  %1443 = vmatprep.mubr.f32.mxu0 0.0
  %1444 = vmatmul.mubr.f32.gmra.mrb[0].mxu0 %v1236
  %v1445 = vpop.f32.mrb[0].mxu0
  %v1446 = vadd.f32 %v1160, %v1445
  %v1447 = vpop.f32.mrb[0].mxu0
  %1448 = vmatprep.mubr.f32.mxu0 0.0
  %1449 = vmatmul.mubr.f32.gmra.mrb[0].mxu0 %v1239
  %v1450 = vpop.f32.mrb[0].mxu0
  %v1451 = vadd.f32 %v1160, %v1450
  %v1452 = vpop.f32.mrb[0].mxu0
  %1453 = vmatprep.mubr.f32.mxu0 0.0
  %1454 = vmatmul.mubr.f32.gmra.mrb[0].mxu0 %v1242
  %v1455 = vpop.f32.mrb[0].mxu0
  %v1456 = vadd.f32 %v1160, %v1455
  %v1457 = vpop.f32.mrb[0].mxu0
  %1458 = vmatprep.mubr.f32.mxu0 0.0
  %1459 = vmatmul.mubr.f32.gmra.mrb[0].mxu0 %v1245
  %v1460 = vpop.f32.mrb[0].mxu0
  %v1461 = vadd.f32 %v1160, %v1460
  %v1462 = vpop.f32.mrb[0].mxu0
  %1463 = vmatprep.mubr.f32.mxu0 0.0
  %1464 = vmatmul.mubr.f32.gmra.mrb[0].mxu0 %v1248
  %v1465 = vpop.f32.mrb[0].mxu0
  %v1466 = vadd.f32 %v1160, %v1465
  %v1467 = vpop.f32.mrb[0].mxu0
  %1468 = vmatprep.mubr.f32.mxu0 0.0
  %1469 = vmatmul.mubr.f32.gmra.mrb[0].mxu0 %v1251
  %v1470 = vpop.f32.mrb[0].mxu0
  %v1471 = vadd.f32 %v1160, %v1470
  %v1472 = vpop.f32.mrb[0].mxu0
  %1473 = vmatprep.mubr.f32.mxu0 0.0
  %1474 = vmatmul.mubr.f32.gmra.mrb[0].mxu0 %v1254
  %v1475 = vpop.f32.mrb[0].mxu0
  %v1476 = vadd.f32 %v1160, %v1475
  %v1477 = vpop.f32.mrb[0].mxu0
  %1478 = vmatprep.mubr.f32.mxu0 0.0
  %1479 = vmatmul.mubr.f32.gmra.mrb[0].mxu0 %v1257
  %v1480 = vpop.f32.mrb[0].mxu0
  %v1481 = vadd.f32 %v1160, %v1480
  %v1482 = vpop.f32.mrb[0].mxu0
  %1483 = vdwg.mxu0
  %vm1484 = vcmask 31744
  %1485 = vst.msk [vmem:[%s9] sm:$0xff] %vm1484, %v1326
  %1486 = vst.msk [vmem:[%s9 + $0x8] sm:$0xff] %vm1484, %v1331
  %1487 = vst.msk [vmem:[%s9 + $0x10] sm:$0xff] %vm1484, %v1336
  %1488 = vst.msk [vmem:[%s9 + $0x18] sm:$0xff] %vm1484, %v1341
  %1489 = vst.msk [vmem:[%s9 + $0x20] sm:$0xff] %vm1484, %v1346
  %1490 = vst.msk [vmem:[%s9 + $0x28] sm:$0xff] %vm1484, %v1351
  %1491 = vst.msk [vmem:[%s9 + $0x30] sm:$0xff] %vm1484, %v1356
  %1492 = vst.msk [vmem:[%s9 + $0x38] sm:$0xff] %vm1484, %v1361
  %1493 = vst.msk [vmem:[%s9 + $0x40] sm:$0xff] %vm1484, %v1366
  %1494 = vst.msk [vmem:[%s9 + $0x48] sm:$0xff] %vm1484, %v1371
  %1495 = vst.msk [vmem:[%s9 + $0x50] sm:$0xff] %vm1484, %v1376
  %1496 = vst.msk [vmem:[%s9 + $0x58] sm:$0xff] %vm1484, %v1381
  %1497 = vst.msk [vmem:[%s9 + $0x60] sm:$0xff] %vm1484, %v1386
  %1498 = vst.msk [vmem:[%s9 + $0x68] sm:$0xff] %vm1484, %v1391
  %1499 = vst.msk [vmem:[%s9 + $0x70] sm:$0xff] %vm1484, %v1396
  %1500 = vst.msk [vmem:[%s9 + $0x78] sm:$0xff] %vm1484, %v1401
  %1501 = vst.msk [vmem:[%s9 + $0x80] sm:$0xff] %vm1484, %v1406
  %1502 = vst.msk [vmem:[%s9 + $0x88] sm:$0xff] %vm1484, %v1411
  %1503 = vst.msk [vmem:[%s9 + $0x90] sm:$0xff] %vm1484, %v1416
  %1504 = vst.msk [vmem:[%s9 + $0x98] sm:$0xff] %vm1484, %v1421
  %1505 = vst.msk [vmem:[%s9 + $0xa0] sm:$0xff] %vm1484, %v1426
  %1506 = vst.msk [vmem:[%s9 + $0xa8] sm:$0xff] %vm1484, %v1431
  %1507 = vst.msk [vmem:[%s9 + $0xb0] sm:$0xff] %vm1484, %v1436
  %1508 = vst.msk [vmem:[%s9 + $0xb8] sm:$0xff] %vm1484, %v1441
  %1509 = vst.msk [vmem:[%s9 + $0xc0] sm:$0xff] %vm1484, %v1446
  %1510 = vst.msk [vmem:[%s9 + $0xc8] sm:$0xff] %vm1484, %v1451
  %1511 = vst.msk [vmem:[%s9 + $0xd0] sm:$0xff] %vm1484, %v1456
  %1512 = vst.msk [vmem:[%s9 + $0xd8] sm:$0xff] %vm1484, %v1461
  %1513 = vst.msk [vmem:[%s9 + $0xe0] sm:$0xff] %vm1484, %v1466
  %1514 = vst.msk [vmem:[%s9 + $0xe8] sm:$0xff] %vm1484, %v1471
  %1515 = vst.msk [vmem:[%s9 + $0xf0] sm:$0xff] %vm1484, %v1476
  %1516 = vst.msk [vmem:[%s9 + $0xf8] sm:$0xff] %vm1484, %v1481
  // Predicated region
  $region38: #{tpu_custom_call.1} parent=0 // pred_check
    _
  $region39: #{tpu_custom_call.1} parent=0 // pred_check_branch
    %1518 = sbr.rel (0) target = $region41
  $region40: #{tpu_custom_call.1} parent=0 // pred_region
    _
  $region41: #{tpu_custom_call.1} parent=0 // pred_fallthru
    _
  // Predicated region
  $region42: #{tpu_custom_call.1} parent=0 // pred_check
    _
  $region43: #{tpu_custom_call.1} parent=0 // pred_check_branch
    %1520 = sbr.rel (0) target = $region45
  $region44: #{tpu_custom_call.1} parent=0 // pred_region
    _
  $region45: #{tpu_custom_call.1} parent=0 // pred_fallthru
    _

// kernel: tpu_custom_call.1
$region0: #{tpu_custom_call.1}
  #allocation0 [shape = 'u32[]', space=smem, size = 0x4, offset = 0x4, fixed_abs, tag = 'smem constant byte address 0x4 - core index']
  #allocation1 [shape = 'u32[144,128]{1,0:T(1,128)}', space=vmem, size = 0x12000, scoped, tag = 'internal scratch']
  %s0 = inlined_call_operand.vmem [shape: f32[256,16], index: 0, kind: input, shape index: {}]
  %s1 = inlined_call_operand.vmem [shape: f32[16,32], index: 1, kind: input, shape index: {}]
  %s2 = inlined_call_operand.vmem [shape: f32[1,32], index: 2, kind: input, shape index: {}]
  %s3 = inlined_call_operand.vmem [shape: f32[32,16], index: 3, kind: input, shape index: {}]
  %s4 = inlined_call_operand.vmem [shape: f32[1,16], index: 4, kind: input, shape index: {}]
  %s5 = inlined_call_operand.vmem [shape: f32[16,8], index: 5, kind: input, shape index: {}]
  %s6 = inlined_call_operand.vmem [shape: f32[1,8], index: 6, kind: input, shape index: {}]
  %s7 = inlined_call_operand.vmem [shape: f32[8,4], index: 7, kind: input, shape index: {}]
  %s8 = inlined_call_operand.vmem [shape: f32[1,4], index: 8, kind: input, shape index: {}]
  %s9 = inlined_call_operand.vmem [shape: f32[256,4], index: 9, kind: output, shape index: {}]
  %s10 = sld [smem:[#allocation0]]
  $region46: #{tpu_custom_call.1} parent=0
    _
  %s12 = ssub.s32 1, %s10
  %s13 = scalar_select 0, %s12, %s10
  // Predicated region
  $region2: #{tpu_custom_call.1} parent=0 // pred_check
    _
  $region3: #{tpu_custom_call.1} parent=0 // pred_check_branch
    %15 = sbr.rel (0) target = $region5
  $region4: #{tpu_custom_call.1} parent=0 // pred_region
    _
  $region5: #{tpu_custom_call.1} parent=0 // pred_fallthru
    _
  // Predicated region
  $region6: #{tpu_custom_call.1} parent=0 // pred_check
    _
  $region7: #{tpu_custom_call.1} parent=0 // pred_check_branch
    %17 = sbr.rel (0) target = $region9
  $region8: #{tpu_custom_call.1} parent=0 // pred_region
    _
  $region9: #{tpu_custom_call.1} parent=0 // pred_fallthru
    _
  // Predicated region
  $region10: #{tpu_custom_call.1} parent=0 // pred_check
    _
  $region11: #{tpu_custom_call.1} parent=0 // pred_check_branch
    %19 = sbr.rel (0) target = $region13
  $region12: #{tpu_custom_call.1} parent=0 // pred_region
    _
  $region13: #{tpu_custom_call.1} parent=0 // pred_fallthru
    _
  // Predicated region
  $region14: #{tpu_custom_call.1} parent=0 // pred_check
    _
  $region15: #{tpu_custom_call.1} parent=0 // pred_check_branch
    %21 = sbr.rel (0) target = $region17
  $region16: #{tpu_custom_call.1} parent=0 // pred_region
    _
  $region17: #{tpu_custom_call.1} parent=0 // pred_fallthru
    _
  // Predicated region
  $region18: #{tpu_custom_call.1} parent=0 // pred_check
    _
  $region19: #{tpu_custom_call.1} parent=0 // pred_check_branch
    %23 = sbr.rel (0) target = $region21
  $region20: #{tpu_custom_call.1} parent=0 // pred_region
    _
  $region21: #{tpu_custom_call.1} parent=0 // pred_fallthru
    _
  // Predicated region
  $region22: #{tpu_custom_call.1} parent=0 // pred_check
    _
  $region23: #{tpu_custom_call.1} parent=0 // pred_check_branch
    %25 = sbr.rel (0) target = $region25
  $region24: #{tpu_custom_call.1} parent=0 // pred_region
    _
  $region25: #{tpu_custom_call.1} parent=0 // pred_fallthru
    _
  // Predicated region
  $region26: #{tpu_custom_call.1} parent=0 // pred_check
    _
  $region27: #{tpu_custom_call.1} parent=0 // pred_check_branch
    %27 = sbr.rel (0) target = $region29
  $region28: #{tpu_custom_call.1} parent=0 // pred_region
    _
  $region29: #{tpu_custom_call.1} parent=0 // pred_fallthru
    _
  // Predicated region
  $region30: #{tpu_custom_call.1} parent=0 // pred_check
    _
  $region31: #{tpu_custom_call.1} parent=0 // pred_check_branch
    %29 = sbr.rel (0) target = $region33
  $region32: #{tpu_custom_call.1} parent=0 // pred_region
    _
  $region33: #{tpu_custom_call.1} parent=0 // pred_fallthru
    _
  // Predicated region
  $region34: #{tpu_custom_call.1} parent=0 // pred_check
    _
  $region35: #{tpu_custom_call.1} parent=0 // pred_check_branch
    %31 = sbr.rel (0) target = $region37
  $region36: #{tpu_custom_call.1} parent=0 // pred_region
    _
  $region37: #{tpu_custom_call.1} parent=0 // pred_fallthru
    _
  %v32 = vld [vmem:[%s0] sm:$0xff]
  %v33 = vld [vmem:[%s0 + $0x8] sm:$0xff]
  %v34 = vld [vmem:[%s0 + $0x10] sm:$0xff]
  %v35 = vld [vmem:[%s0 + $0x18] sm:$0xff]
  %v36 = vld [vmem:[%s0 + $0x20] sm:$0xff]
  %v37 = vld [vmem:[%s0 + $0x28] sm:$0xff]
  %v38 = vld [vmem:[%s0 + $0x30] sm:$0xff]
  %v39 = vld [vmem:[%s0 + $0x38] sm:$0xff]
  %v40 = vld [vmem:[%s0 + $0x40] sm:$0xff]
  %v41 = vld [vmem:[%s0 + $0x48] sm:$0xff]
  %v42 = vld [vmem:[%s0 + $0x50] sm:$0xff]
  %v43 = vld [vmem:[%s0 + $0x58] sm:$0xff]
  %v44 = vld [vmem:[%s0 + $0x60] sm:$0xff]
  %v45 = vld [vmem:[%s0 + $0x68] sm:$0xff]
  %v46 = vld [vmem:[%s0 + $0x70] sm:$0xff]
  %v47 = vld [vmem:[%s0 + $0x78] sm:$0xff]
  %v48 = vld [vmem:[%s0 + $0x80] sm:$0xff]
  %v49 = vld [vmem:[%s0 + $0x88] sm:$0xff]
  %v50 = vld [vmem:[%s0 + $0x90] sm:$0xff]
  %v51 = vld [vmem:[%s0 + $0x98] sm:$0xff]
  %v52 = vld [vmem:[%s0 + $0xa0] sm:$0xff]
  %v53 = vld [vmem:[%s0 + $0xa8] sm:$0xff]
  %v54 = vld [vmem:[%s0 + $0xb0] sm:$0xff]
  %v55 = vld [vmem:[%s0 + $0xb8] sm:$0xff]
  %v56 = vld [vmem:[%s0 + $0xc0] sm:$0xff]
  %v57 = vld [vmem:[%s0 + $0xc8] sm:$0xff]
  %v58 = vld [vmem:[%s0 + $0xd0] sm:$0xff]
  %v59 = vld [vmem:[%s0 + $0xd8] sm:$0xff]
  %v60 = vld [vmem:[%s0 + $0xe0] sm:$0xff]
  %v61 = vld [vmem:[%s0 + $0xe8] sm:$0xff]
  %v62 = vld [vmem:[%s0 + $0xf0] sm:$0xff]
  %v63 = vld [vmem:[%s0 + $0xf8] sm:$0xff]
  %v64 = vld [vmem:[%s1] sm:$0xff]
  %v65 = vld [vmem:[%s1 + $0x8] sm:$0xff]
  %v66 = vld [vmem:[%s2] sm:$0x1]
  %v68 = vlaneseq
  %v69 = vshrl.u32 %v68, 7
  %v70 = vsub.s32 0, %v69
  %v71 = vrot.slane %v66, %v70
  %vm73 = vcmask 130048
  %v75 = vsel %vm73, %v32, 0
  %v78 = vsel %vm73, %v33, 0
  %v81 = vsel %vm73, %v34, 0
  %v84 = vsel %vm73, %v35, 0
  %v87 = vsel %vm73, %v36, 0
  %v90 = vsel %vm73, %v37, 0
  %v93 = vsel %vm73, %v38, 0
  %v96 = vsel %vm73, %v39, 0
  %v99 = vsel %vm73, %v40, 0
  %v102 = vsel %vm73, %v41, 0
  %v105 = vsel %vm73, %v42, 0
  %v108 = vsel %vm73, %v43, 0
  %v111 = vsel %vm73, %v44, 0
  %v114 = vsel %vm73, %v45, 0
  %v117 = vsel %vm73, %v46, 0
  %v120 = vsel %vm73, %v47, 0
  %v123 = vsel %vm73, %v48, 0
  %v126 = vsel %vm73, %v49, 0
  %v129 = vsel %vm73, %v50, 0
  %v132 = vsel %vm73, %v51, 0
  %v135 = vsel %vm73, %v52, 0
  %v138 = vsel %vm73, %v53, 0
  %v141 = vsel %vm73, %v54, 0
  %v144 = vsel %vm73, %v55, 0
  %v147 = vsel %vm73, %v56, 0
  %v150 = vsel %vm73, %v57, 0
  %v153 = vsel %vm73, %v58, 0
  %v156 = vsel %vm73, %v59, 0
  %v159 = vsel %vm73, %v60, 0
  %v162 = vsel %vm73, %v61, 0
  %v165 = vsel %vm73, %v62, 0
  %v168 = vsel %vm73, %v63, 0
  %170 = vmatprep.subr.mxu0 0.0
  %171 = vmatpush1.msra.mxu0 %v64
  %172 = vmatprep.subr.mxu0 0.0
  %173 = vmatpush1.msra.mxu0 %v65
  %174 = vmatprep.subr.mxu0 0.0
  %175 = vmatpush1.msra.mxu0 0.0
  %176 = vmatprep.subr.mxu0 0.0
  %177 = vmatpush1.msra.mxu0 0.0
  %178 = vmatprep.subr.mxu0 0.0
  %179 = vmatpush1.msra.mxu0 0.0
  %180 = vmatprep.subr.mxu0 0.0
  %181 = vmatpush1.msra.mxu0 0.0
  %182 = vmatprep.subr.mxu0 0.0
  %183 = vmatpush1.msra.mxu0 0.0
  %184 = vmatprep.subr.mxu0 0.0
  %185 = vmatpush1.msra.mxu0 0.0
  %186 = vmatprep.subr.mxu0 0.0
  %187 = vmatpush1.msra.mxu0 0.0
  %188 = vmatprep.subr.mxu0 0.0
  %189 = vmatpush1.msra.mxu0 0.0
  %190 = vmatprep.subr.mxu0 0.0
  %191 = vmatpush1.msra.mxu0 0.0
  %192 = vmatprep.subr.mxu0 0.0
  %193 = vmatpush1.msra.mxu0 0.0
  %194 = vmatprep.subr.mxu0 0.0
  %195 = vmatpush1.msra.mxu0 0.0
  %196 = vmatprep.subr.mxu0 0.0
  %197 = vmatpush1.msra.mxu0 0.0
  %198 = vmatprep.subr.mxu0 0.0
  %199 = vmatpush1.msra.mxu0 0.0
  %200 = vmatprep.subr.mxu0 0.0
  %201 = vmatpush1.msra.mxu0 0.0
  %202 = vmatprep.subr.mxu0 0.0
  %203 = vmatpush1.msra.mxu0 0.0
  %204 = vmatprep.subr.mxu0 0.0
  %205 = vmatpush1.msra.mxu0 0.0
  %206 = vmatprep.subr.mxu0 0.0
  %207 = vmatpush1.msra.mxu0 0.0
  %208 = vmatprep.subr.mxu0 0.0
  %209 = vmatpush1.msra.mxu0 0.0
  %210 = vmatprep.subr.mxu0 0.0
  %211 = vmatpush1.msra.mxu0 0.0
  %212 = vmatprep.subr.mxu0 0.0
  %213 = vmatpush1.msra.mxu0 0.0
  %214 = vmatprep.subr.mxu0 0.0
  %215 = vmatpush1.msra.mxu0 0.0
  %216 = vmatprep.subr.mxu0 0.0
  %217 = vmatpush1.msra.mxu0 0.0
  %218 = vmatprep.subr.mxu0 0.0
  %219 = vmatpush1.msra.mxu0 0.0
  %220 = vmatprep.subr.mxu0 0.0
  %221 = vmatpush1.msra.mxu0 0.0
  %222 = vmatprep.subr.mxu0 0.0
  %223 = vmatpush1.msra.mxu0 0.0
  %224 = vmatprep.subr.mxu0 0.0
  %225 = vmatpush1.msra.mxu0 0.0
  %226 = vmatprep.subr.mxu0 0.0
  %227 = vmatpush1.msra.mxu0 0.0
  %228 = vmatprep.subr.mxu0 0.0
  %229 = vmatpush1.msra.mxu0 0.0
  %230 = vmatprep.subr.mxu0 0.0
  %231 = vmatpush1.msra.mxu0 0.0
  %232 = vmatprep.subr.mxu0 0.0
  %233 = vmatpush1.msra.mxu0 0.0
  %234 = vmatprep.mubr.f32.mxu0 0.0
  %235 = vmatmul.mubr.f32.gmra.mrb[0].mxu0 %v75
  %v236 = vpop.f32.mrb[0].mxu0
  %v237 = vadd.f32 %v71, %v236
  %v238 = vpop.f32.mrb[0].mxu0
  %239 = vmatprep.mubr.f32.mxu0 0.0
  %240 = vmatmul.mubr.f32.gmra.mrb[0].mxu0 %v78
  %v241 = vpop.f32.mrb[0].mxu0
  %v242 = vadd.f32 %v71, %v241
  %v243 = vpop.f32.mrb[0].mxu0
  %244 = vmatprep.mubr.f32.mxu0 0.0
  %245 = vmatmul.mubr.f32.gmra.mrb[0].mxu0 %v81
  %v246 = vpop.f32.mrb[0].mxu0
  %v247 = vadd.f32 %v71, %v246
  %v248 = vpop.f32.mrb[0].mxu0
  %249 = vmatprep.mubr.f32.mxu0 0.0
  %250 = vmatmul.mubr.f32.gmra.mrb[0].mxu0 %v84
  %v251 = vpop.f32.mrb[0].mxu0
  %v252 = vadd.f32 %v71, %v251
  %v253 = vpop.f32.mrb[0].mxu0
  %254 = vmatprep.mubr.f32.mxu0 0.0
  %255 = vmatmul.mubr.f32.gmra.mrb[0].mxu0 %v87
  %v256 = vpop.f32.mrb[0].mxu0
  %v257 = vadd.f32 %v71, %v256
  %v258 = vpop.f32.mrb[0].mxu0
  %259 = vmatprep.mubr.f32.mxu0 0.0
  %260 = vmatmul.mubr.f32.gmra.mrb[0].mxu0 %v90
  %v261 = vpop.f32.mrb[0].mxu0
  %v262 = vadd.f32 %v71, %v261
  %v263 = vpop.f32.mrb[0].mxu0
  %264 = vmatprep.mubr.f32.mxu0 0.0
  %265 = vmatmul.mubr.f32.gmra.mrb[0].mxu0 %v93
  %v266 = vpop.f32.mrb[0].mxu0
  %v267 = vadd.f32 %v71, %v266
  %v268 = vpop.f32.mrb[0].mxu0
  %269 = vmatprep.mubr.f32.mxu0 0.0
  %270 = vmatmul.mubr.f32.gmra.mrb[0].mxu0 %v96
  %v271 = vpop.f32.mrb[0].mxu0
  %v272 = vadd.f32 %v71, %v271
  %v273 = vpop.f32.mrb[0].mxu0
  %274 = vmatprep.mubr.f32.mxu0 0.0
  %275 = vmatmul.mubr.f32.gmra.mrb[0].mxu0 %v99
  %v276 = vpop.f32.mrb[0].mxu0
  %v277 = vadd.f32 %v71, %v276
  %v278 = vpop.f32.mrb[0].mxu0
  %279 = vmatprep.mubr.f32.mxu0 0.0
  %280 = vmatmul.mubr.f32.gmra.mrb[0].mxu0 %v102
  %v281 = vpop.f32.mrb[0].mxu0
  %v282 = vadd.f32 %v71, %v281
  %v283 = vpop.f32.mrb[0].mxu0
  %284 = vmatprep.mubr.f32.mxu0 0.0
  %285 = vmatmul.mubr.f32.gmra.mrb[0].mxu0 %v105
  %v286 = vpop.f32.mrb[0].mxu0
  %v287 = vadd.f32 %v71, %v286
  %v288 = vpop.f32.mrb[0].mxu0
  %289 = vmatprep.mubr.f32.mxu0 0.0
  %290 = vmatmul.mubr.f32.gmra.mrb[0].mxu0 %v108
  %v291 = vpop.f32.mrb[0].mxu0
  %v292 = vadd.f32 %v71, %v291
  %v293 = vpop.f32.mrb[0].mxu0
  %294 = vmatprep.mubr.f32.mxu0 0.0
  %295 = vmatmul.mubr.f32.gmra.mrb[0].mxu0 %v111
  %v296 = vpop.f32.mrb[0].mxu0
  %v297 = vadd.f32 %v71, %v296
  %v298 = vpop.f32.mrb[0].mxu0
  %299 = vmatprep.mubr.f32.mxu0 0.0
  %300 = vmatmul.mubr.f32.gmra.mrb[0].mxu0 %v114
  %v301 = vpop.f32.mrb[0].mxu0
  %v302 = vadd.f32 %v71, %v301
  %v303 = vpop.f32.mrb[0].mxu0
  %304 = vmatprep.mubr.f32.mxu0 0.0
  %305 = vmatmul.mubr.f32.gmra.mrb[0].mxu0 %v117
  %v306 = vpop.f32.mrb[0].mxu0
  %v307 = vadd.f32 %v71, %v306
  %v308 = vpop.f32.mrb[0].mxu0
  %309 = vmatprep.mubr.f32.mxu0 0.0
  %310 = vmatmul.mubr.f32.gmra.mrb[0].mxu0 %v120
  %v311 = vpop.f32.mrb[0].mxu0
  %v312 = vadd.f32 %v71, %v311
  %v313 = vpop.f32.mrb[0].mxu0
  %314 = vmatprep.mubr.f32.mxu0 0.0
  %315 = vmatmul.mubr.f32.gmra.mrb[0].mxu0 %v123
  %v316 = vpop.f32.mrb[0].mxu0
  %v317 = vadd.f32 %v71, %v316
  %v318 = vpop.f32.mrb[0].mxu0
  %319 = vmatprep.mubr.f32.mxu0 0.0
  %320 = vmatmul.mubr.f32.gmra.mrb[0].mxu0 %v126
  %v321 = vpop.f32.mrb[0].mxu0
  %v322 = vadd.f32 %v71, %v321
  %v323 = vpop.f32.mrb[0].mxu0
  %324 = vmatprep.mubr.f32.mxu0 0.0
  %325 = vmatmul.mubr.f32.gmra.mrb[0].mxu0 %v129
  %v326 = vpop.f32.mrb[0].mxu0
  %v327 = vadd.f32 %v71, %v326
  %v328 = vpop.f32.mrb[0].mxu0
  %329 = vmatprep.mubr.f32.mxu0 0.0
  %330 = vmatmul.mubr.f32.gmra.mrb[0].mxu0 %v132
  %v331 = vpop.f32.mrb[0].mxu0
  %v332 = vadd.f32 %v71, %v331
  %v333 = vpop.f32.mrb[0].mxu0
  %334 = vmatprep.mubr.f32.mxu0 0.0
  %335 = vmatmul.mubr.f32.gmra.mrb[0].mxu0 %v135
  %v336 = vpop.f32.mrb[0].mxu0
  %v337 = vadd.f32 %v71, %v336
  %v338 = vpop.f32.mrb[0].mxu0
  %339 = vmatprep.mubr.f32.mxu0 0.0
  %340 = vmatmul.mubr.f32.gmra.mrb[0].mxu0 %v138
  %v341 = vpop.f32.mrb[0].mxu0
  %v342 = vadd.f32 %v71, %v341
  %v343 = vpop.f32.mrb[0].mxu0
  %344 = vmatprep.mubr.f32.mxu0 0.0
  %345 = vmatmul.mubr.f32.gmra.mrb[0].mxu0 %v141
  %v346 = vpop.f32.mrb[0].mxu0
  %v347 = vadd.f32 %v71, %v346
  %v348 = vpop.f32.mrb[0].mxu0
  %349 = vmatprep.mubr.f32.mxu0 0.0
  %350 = vmatmul.mubr.f32.gmra.mrb[0].mxu0 %v144
  %v351 = vpop.f32.mrb[0].mxu0
  %v352 = vadd.f32 %v71, %v351
  %v353 = vpop.f32.mrb[0].mxu0
  %354 = vmatprep.mubr.f32.mxu0 0.0
  %355 = vmatmul.mubr.f32.gmra.mrb[0].mxu0 %v147
  %v356 = vpop.f32.mrb[0].mxu0
  %v357 = vadd.f32 %v71, %v356
  %v358 = vpop.f32.mrb[0].mxu0
  %359 = vmatprep.mubr.f32.mxu0 0.0
  %360 = vmatmul.mubr.f32.gmra.mrb[0].mxu0 %v150
  %v361 = vpop.f32.mrb[0].mxu0
  %v362 = vadd.f32 %v71, %v361
  %v363 = vpop.f32.mrb[0].mxu0
  %364 = vmatprep.mubr.f32.mxu0 0.0
  %365 = vmatmul.mubr.f32.gmra.mrb[0].mxu0 %v153
  %v366 = vpop.f32.mrb[0].mxu0
  %v367 = vadd.f32 %v71, %v366
  %v368 = vpop.f32.mrb[0].mxu0
  %369 = vmatprep.mubr.f32.mxu0 0.0
  %370 = vmatmul.mubr.f32.gmra.mrb[0].mxu0 %v156
  %v371 = vpop.f32.mrb[0].mxu0
  %v372 = vadd.f32 %v71, %v371
  %v373 = vpop.f32.mrb[0].mxu0
  %374 = vmatprep.mubr.f32.mxu0 0.0
  %375 = vmatmul.mubr.f32.gmra.mrb[0].mxu0 %v159
  %v376 = vpop.f32.mrb[0].mxu0
  %v377 = vadd.f32 %v71, %v376
  %v378 = vpop.f32.mrb[0].mxu0
  %379 = vmatprep.mubr.f32.mxu0 0.0
  %380 = vmatmul.mubr.f32.gmra.mrb[0].mxu0 %v162
  %v381 = vpop.f32.mrb[0].mxu0
  %v382 = vadd.f32 %v71, %v381
  %v383 = vpop.f32.mrb[0].mxu0
  %384 = vmatprep.mubr.f32.mxu0 0.0
  %385 = vmatmul.mubr.f32.gmra.mrb[0].mxu0 %v165
  %v386 = vpop.f32.mrb[0].mxu0
  %v387 = vadd.f32 %v71, %v386
  %v388 = vpop.f32.mrb[0].mxu0
  %389 = vmatprep.mubr.f32.mxu0 0.0
  %390 = vmatmul.mubr.f32.gmra.mrb[0].mxu0 %v168
  %v391 = vpop.f32.mrb[0].mxu0
  %v392 = vadd.f32 %v71, %v391
  %v393 = vpop.f32.mrb[0].mxu0
  %394 = vdwg.mxu0
  %v395 = vmax.f32 %v237, 0.0
  %v396 = vmax.f32 %v242, 0.0
  %v397 = vmax.f32 %v247, 0.0
  %v398 = vmax.f32 %v252, 0.0
  %v399 = vmax.f32 %v257, 0.0
  %v400 = vmax.f32 %v262, 0.0
  %v401 = vmax.f32 %v267, 0.0
  %v402 = vmax.f32 %v272, 0.0
  %v403 = vmax.f32 %v277, 0.0
  %v404 = vmax.f32 %v282, 0.0
  %v405 = vmax.f32 %v287, 0.0
  %v406 = vmax.f32 %v292, 0.0
  %v407 = vmax.f32 %v297, 0.0
  %v408 = vmax.f32 %v302, 0.0
  %v409 = vmax.f32 %v307, 0.0
  %v410 = vmax.f32 %v312, 0.0
  %v411 = vmax.f32 %v317, 0.0
  %v412 = vmax.f32 %v322, 0.0
  %v413 = vmax.f32 %v327, 0.0
  %v414 = vmax.f32 %v332, 0.0
  %v415 = vmax.f32 %v337, 0.0
  %v416 = vmax.f32 %v342, 0.0
  %v417 = vmax.f32 %v347, 0.0
  %v418 = vmax.f32 %v352, 0.0
  %v419 = vmax.f32 %v357, 0.0
  %v420 = vmax.f32 %v362, 0.0
  %v421 = vmax.f32 %v367, 0.0
  %v422 = vmax.f32 %v372, 0.0
  %v423 = vmax.f32 %v377, 0.0
  %v424 = vmax.f32 %v382, 0.0
  %v425 = vmax.f32 %v387, 0.0
  %v426 = vmax.f32 %v392, 0.0
  %v427 = vld [vmem:[%s3] sm:$0xff]
  %v428 = vld [vmem:[%s3 + $0x8] sm:$0xff]
  %v429 = vld [vmem:[%s3 + $0x10] sm:$0xff]
  %v430 = vld [vmem:[%s3 + $0x18] sm:$0xff]
  %v431 = vld [vmem:[%s4] sm:$0x1]
  %v433 = vlaneseq
  %v434 = vshrl.u32 %v433, 7
  %v435 = vsub.s32 0, %v434
  %v436 = vrot.slane %v431, %v435
  %vm438 = vcmask 261120
  %v440 = vsel %vm438, %v395, 0
  %v443 = vsel %vm438, %v396, 0
  %v446 = vsel %vm438, %v397, 0
  %v449 = vsel %vm438, %v398, 0
  %v452 = vsel %vm438, %v399, 0
  %v455 = vsel %vm438, %v400, 0
  %v458 = vsel %vm438, %v401, 0
  %v461 = vsel %vm438, %v402, 0
  %v464 = vsel %vm438, %v403, 0
  %v467 = vsel %vm438, %v404, 0
  %v470 = vsel %vm438, %v405, 0
  %v473 = vsel %vm438, %v406, 0
  %v476 = vsel %vm438, %v407, 0
  %v479 = vsel %vm438, %v408, 0
  %v482 = vsel %vm438, %v409, 0
  %v485 = vsel %vm438, %v410, 0
  %v488 = vsel %vm438, %v411, 0
  %v491 = vsel %vm438, %v412, 0
  %v494 = vsel %vm438, %v413, 0
  %v497 = vsel %vm438, %v414, 0
  %v500 = vsel %vm438, %v415, 0
  %v503 = vsel %vm438, %v416, 0
  %v506 = vsel %vm438, %v417, 0
  %v509 = vsel %vm438, %v418, 0
  %v512 = vsel %vm438, %v419, 0
  %v515 = vsel %vm438, %v420, 0
  %v518 = vsel %vm438, %v421, 0
  %v521 = vsel %vm438, %v422, 0
  %v524 = vsel %vm438, %v423, 0
  %v527 = vsel %vm438, %v424, 0
  %v530 = vsel %vm438, %v425, 0
  %v533 = vsel %vm438, %v426, 0
  %535 = vmatprep.subr.mxu0 0.0
  %536 = vmatpush1.msra.mxu0 %v427
  %537 = vmatprep.subr.mxu0 0.0
  %538 = vmatpush1.msra.mxu0 %v428
  %539 = vmatprep.subr.mxu0 0.0
  %540 = vmatpush1.msra.mxu0 %v429
  %541 = vmatprep.subr.mxu0 0.0
  %542 = vmatpush1.msra.mxu0 %v430
  %543 = vmatprep.subr.mxu0 0.0
  %544 = vmatpush1.msra.mxu0 0.0
  %545 = vmatprep.subr.mxu0 0.0
  %546 = vmatpush1.msra.mxu0 0.0
  %547 = vmatprep.subr.mxu0 0.0
  %548 = vmatpush1.msra.mxu0 0.0
  %549 = vmatprep.subr.mxu0 0.0
  %550 = vmatpush1.msra.mxu0 0.0
  %551 = vmatprep.subr.mxu0 0.0
  %552 = vmatpush1.msra.mxu0 0.0
  %553 = vmatprep.subr.mxu0 0.0
  %554 = vmatpush1.msra.mxu0 0.0
  %555 = vmatprep.subr.mxu0 0.0
  %556 = vmatpush1.msra.mxu0 0.0
  %557 = vmatprep.subr.mxu0 0.0
  %558 = vmatpush1.msra.mxu0 0.0
  %559 = vmatprep.subr.mxu0 0.0
  %560 = vmatpush1.msra.mxu0 0.0
  %561 = vmatprep.subr.mxu0 0.0
  %562 = vmatpush1.msra.mxu0 0.0
  %563 = vmatprep.subr.mxu0 0.0
  %564 = vmatpush1.msra.mxu0 0.0
  %565 = vmatprep.subr.mxu0 0.0
  %566 = vmatpush1.msra.mxu0 0.0
  %567 = vmatprep.subr.mxu0 0.0
  %568 = vmatpush1.msra.mxu0 0.0
  %569 = vmatprep.subr.mxu0 0.0
  %570 = vmatpush1.msra.mxu0 0.0
  %571 = vmatprep.subr.mxu0 0.0
  %572 = vmatpush1.msra.mxu0 0.0
  %573 = vmatprep.subr.mxu0 0.0
  %574 = vmatpush1.msra.mxu0 0.0
  %575 = vmatprep.subr.mxu0 0.0
  %576 = vmatpush1.msra.mxu0 0.0
  %577 = vmatprep.subr.mxu0 0.0
  %578 = vmatpush1.msra.mxu0 0.0
  %579 = vmatprep.subr.mxu0 0.0
  %580 = vmatpush1.msra.mxu0 0.0
  %581 = vmatprep.subr.mxu0 0.0
  %582 = vmatpush1.msra.mxu0 0.0
  %583 = vmatprep.subr.mxu0 0.0
  %584 = vmatpush1.msra.mxu0 0.0
  %585 = vmatprep.subr.mxu0 0.0
  %586 = vmatpush1.msra.mxu0 0.0
  %587 = vmatprep.subr.mxu0 0.0
  %588 = vmatpush1.msra.mxu0 0.0
  %589 = vmatprep.subr.mxu0 0.0
  %590 = vmatpush1.msra.mxu0 0.0
  %591 = vmatprep.subr.mxu0 0.0
  %592 = vmatpush1.msra.mxu0 0.0
  %593 = vmatprep.subr.mxu0 0.0
  %594 = vmatpush1.msra.mxu0 0.0
  %595 = vmatprep.subr.mxu0 0.0
  %596 = vmatpush1.msra.mxu0 0.0
  %597 = vmatprep.subr.mxu0 0.0
  %598 = vmatpush1.msra.mxu0 0.0
  %599 = vmatprep.mubr.f32.mxu0 0.0
  %600 = vmatmul.mubr.f32.gmra.mrb[0].mxu0 %v440
  %v601 = vpop.f32.mrb[0].mxu0
  %v602 = vadd.f32 %v436, %v601
  %v603 = vpop.f32.mrb[0].mxu0
  %604 = vmatprep.mubr.f32.mxu0 0.0
  %605 = vmatmul.mubr.f32.gmra.mrb[0].mxu0 %v443
  %v606 = vpop.f32.mrb[0].mxu0
  %v607 = vadd.f32 %v436, %v606
  %v608 = vpop.f32.mrb[0].mxu0
  %609 = vmatprep.mubr.f32.mxu0 0.0
  %610 = vmatmul.mubr.f32.gmra.mrb[0].mxu0 %v446
  %v611 = vpop.f32.mrb[0].mxu0
  %v612 = vadd.f32 %v436, %v611
  %v613 = vpop.f32.mrb[0].mxu0
  %614 = vmatprep.mubr.f32.mxu0 0.0
  %615 = vmatmul.mubr.f32.gmra.mrb[0].mxu0 %v449
  %v616 = vpop.f32.mrb[0].mxu0
  %v617 = vadd.f32 %v436, %v616
  %v618 = vpop.f32.mrb[0].mxu0
  %619 = vmatprep.mubr.f32.mxu0 0.0
  %620 = vmatmul.mubr.f32.gmra.mrb[0].mxu0 %v452
  %v621 = vpop.f32.mrb[0].mxu0
  %v622 = vadd.f32 %v436, %v621
  %v623 = vpop.f32.mrb[0].mxu0
  %624 = vmatprep.mubr.f32.mxu0 0.0
  %625 = vmatmul.mubr.f32.gmra.mrb[0].mxu0 %v455
  %v626 = vpop.f32.mrb[0].mxu0
  %v627 = vadd.f32 %v436, %v626
  %v628 = vpop.f32.mrb[0].mxu0
  %629 = vmatprep.mubr.f32.mxu0 0.0
  %630 = vmatmul.mubr.f32.gmra.mrb[0].mxu0 %v458
  %v631 = vpop.f32.mrb[0].mxu0
  %v632 = vadd.f32 %v436, %v631
  %v633 = vpop.f32.mrb[0].mxu0
  %634 = vmatprep.mubr.f32.mxu0 0.0
  %635 = vmatmul.mubr.f32.gmra.mrb[0].mxu0 %v461
  %v636 = vpop.f32.mrb[0].mxu0
  %v637 = vadd.f32 %v436, %v636
  %v638 = vpop.f32.mrb[0].mxu0
  %639 = vmatprep.mubr.f32.mxu0 0.0
  %640 = vmatmul.mubr.f32.gmra.mrb[0].mxu0 %v464
  %v641 = vpop.f32.mrb[0].mxu0
  %v642 = vadd.f32 %v436, %v641
  %v643 = vpop.f32.mrb[0].mxu0
  %644 = vmatprep.mubr.f32.mxu0 0.0
  %645 = vmatmul.mubr.f32.gmra.mrb[0].mxu0 %v467
  %v646 = vpop.f32.mrb[0].mxu0
  %v647 = vadd.f32 %v436, %v646
  %v648 = vpop.f32.mrb[0].mxu0
  %649 = vmatprep.mubr.f32.mxu0 0.0
  %650 = vmatmul.mubr.f32.gmra.mrb[0].mxu0 %v470
  %v651 = vpop.f32.mrb[0].mxu0
  %v652 = vadd.f32 %v436, %v651
  %v653 = vpop.f32.mrb[0].mxu0
  %654 = vmatprep.mubr.f32.mxu0 0.0
  %655 = vmatmul.mubr.f32.gmra.mrb[0].mxu0 %v473
  %v656 = vpop.f32.mrb[0].mxu0
  %v657 = vadd.f32 %v436, %v656
  %v658 = vpop.f32.mrb[0].mxu0
  %659 = vmatprep.mubr.f32.mxu0 0.0
  %660 = vmatmul.mubr.f32.gmra.mrb[0].mxu0 %v476
  %v661 = vpop.f32.mrb[0].mxu0
  %v662 = vadd.f32 %v436, %v661
  %v663 = vpop.f32.mrb[0].mxu0
  %664 = vmatprep.mubr.f32.mxu0 0.0
  %665 = vmatmul.mubr.f32.gmra.mrb[0].mxu0 %v479
  %v666 = vpop.f32.mrb[0].mxu0
  %v667 = vadd.f32 %v436, %v666
  %v668 = vpop.f32.mrb[0].mxu0
  %669 = vmatprep.mubr.f32.mxu0 0.0
  %670 = vmatmul.mubr.f32.gmra.mrb[0].mxu0 %v482
  %v671 = vpop.f32.mrb[0].mxu0
  %v672 = vadd.f32 %v436, %v671
  %v673 = vpop.f32.mrb[0].mxu0
  %674 = vmatprep.mubr.f32.mxu0 0.0
  %675 = vmatmul.mubr.f32.gmra.mrb[0].mxu0 %v485
  %v676 = vpop.f32.mrb[0].mxu0
  %v677 = vadd.f32 %v436, %v676
  %v678 = vpop.f32.mrb[0].mxu0
  %679 = vmatprep.mubr.f32.mxu0 0.0
  %680 = vmatmul.mubr.f32.gmra.mrb[0].mxu0 %v488
  %v681 = vpop.f32.mrb[0].mxu0
  %v682 = vadd.f32 %v436, %v681
  %v683 = vpop.f32.mrb[0].mxu0
  %684 = vmatprep.mubr.f32.mxu0 0.0
  %685 = vmatmul.mubr.f32.gmra.mrb[0].mxu0 %v491
  %v686 = vpop.f32.mrb[0].mxu0
  %v687 = vadd.f32 %v436, %v686
  %v688 = vpop.f32.mrb[0].mxu0
  %689 = vmatprep.mubr.f32.mxu0 0.0
  %690 = vmatmul.mubr.f32.gmra.mrb[0].mxu0 %v494
  %v691 = vpop.f32.mrb[0].mxu0
  %v692 = vadd.f32 %v436, %v691
  %v693 = vpop.f32.mrb[0].mxu0
  %694 = vmatprep.mubr.f32.mxu0 0.0
  %695 = vmatmul.mubr.f32.gmra.mrb[0].mxu0 %v497
  %v696 = vpop.f32.mrb[0].mxu0
  %v697 = vadd.f32 %v436, %v696
  %v698 = vpop.f32.mrb[0].mxu0
  %699 = vmatprep.mubr.f32.mxu0 0.0
  %700 = vmatmul.mubr.f32.gmra.mrb[0].mxu0 %v500
  %v701 = vpop.f32.mrb[0].mxu0
  %v702 = vadd.f32 %v436, %v701
  %v703 = vpop.f32.mrb[0].mxu0
  %704 = vmatprep.mubr.f32.mxu0 0.0
  %705 = vmatmul.mubr.f32.gmra.mrb[0].mxu0 %v503
  %v706 = vpop.f32.mrb[0].mxu0
  %v707 = vadd.f32 %v436, %v706
  %v708 = vpop.f32.mrb[0].mxu0
  %709 = vmatprep.mubr.f32.mxu0 0.0
  %710 = vmatmul.mubr.f32.gmra.mrb[0].mxu0 %v506
  %v711 = vpop.f32.mrb[0].mxu0
  %v712 = vadd.f32 %v436, %v711
  %v713 = vpop.f32.mrb[0].mxu0
  %714 = vmatprep.mubr.f32.mxu0 0.0
  %715 = vmatmul.mubr.f32.gmra.mrb[0].mxu0 %v509
  %v716 = vpop.f32.mrb[0].mxu0
  %v717 = vadd.f32 %v436, %v716
  %v718 = vpop.f32.mrb[0].mxu0
  %719 = vmatprep.mubr.f32.mxu0 0.0
  %720 = vmatmul.mubr.f32.gmra.mrb[0].mxu0 %v512
  %v721 = vpop.f32.mrb[0].mxu0
  %v722 = vadd.f32 %v436, %v721
  %v723 = vpop.f32.mrb[0].mxu0
  %724 = vmatprep.mubr.f32.mxu0 0.0
  %725 = vmatmul.mubr.f32.gmra.mrb[0].mxu0 %v515
  %v726 = vpop.f32.mrb[0].mxu0
  %v727 = vadd.f32 %v436, %v726
  %v728 = vpop.f32.mrb[0].mxu0
  %729 = vmatprep.mubr.f32.mxu0 0.0
  %730 = vmatmul.mubr.f32.gmra.mrb[0].mxu0 %v518
  %v731 = vpop.f32.mrb[0].mxu0
  %v732 = vadd.f32 %v436, %v731
  %v733 = vpop.f32.mrb[0].mxu0
  %734 = vmatprep.mubr.f32.mxu0 0.0
  %735 = vmatmul.mubr.f32.gmra.mrb[0].mxu0 %v521
  %v736 = vpop.f32.mrb[0].mxu0
  %v737 = vadd.f32 %v436, %v736
  %v738 = vpop.f32.mrb[0].mxu0
  %739 = vmatprep.mubr.f32.mxu0 0.0
  %740 = vmatmul.mubr.f32.gmra.mrb[0].mxu0 %v524
  %v741 = vpop.f32.mrb[0].mxu0
  %v742 = vadd.f32 %v436, %v741
  %v743 = vpop.f32.mrb[0].mxu0
  %744 = vmatprep.mubr.f32.mxu0 0.0
  %745 = vmatmul.mubr.f32.gmra.mrb[0].mxu0 %v527
  %v746 = vpop.f32.mrb[0].mxu0
  %v747 = vadd.f32 %v436, %v746
  %v748 = vpop.f32.mrb[0].mxu0
  %749 = vmatprep.mubr.f32.mxu0 0.0
  %750 = vmatmul.mubr.f32.gmra.mrb[0].mxu0 %v530
  %v751 = vpop.f32.mrb[0].mxu0
  %v752 = vadd.f32 %v436, %v751
  %v753 = vpop.f32.mrb[0].mxu0
  %754 = vmatprep.mubr.f32.mxu0 0.0
  %755 = vmatmul.mubr.f32.gmra.mrb[0].mxu0 %v533
  %v756 = vpop.f32.mrb[0].mxu0
  %v757 = vadd.f32 %v436, %v756
  %v758 = vpop.f32.mrb[0].mxu0
  %759 = vdwg.mxu0
  %v760 = vmax.f32 %v602, 0.0
  %v761 = vmax.f32 %v607, 0.0
  %v762 = vmax.f32 %v612, 0.0
  %v763 = vmax.f32 %v617, 0.0
  %v764 = vmax.f32 %v622, 0.0
  %v765 = vmax.f32 %v627, 0.0
  %v766 = vmax.f32 %v632, 0.0
  %v767 = vmax.f32 %v637, 0.0
  %v768 = vmax.f32 %v642, 0.0
  %v769 = vmax.f32 %v647, 0.0
  %v770 = vmax.f32 %v652, 0.0
  %v771 = vmax.f32 %v657, 0.0
  %v772 = vmax.f32 %v662, 0.0
  %v773 = vmax.f32 %v667, 0.0
  %v774 = vmax.f32 %v672, 0.0
  %v775 = vmax.f32 %v677, 0.0
  %v776 = vmax.f32 %v682, 0.0
  %v777 = vmax.f32 %v687, 0.0
  %v778 = vmax.f32 %v692, 0.0
  %v779 = vmax.f32 %v697, 0.0
  %v780 = vmax.f32 %v702, 0.0
  %v781 = vmax.f32 %v707, 0.0
  %v782 = vmax.f32 %v712, 0.0
  %v783 = vmax.f32 %v717, 0.0
  %v784 = vmax.f32 %v722, 0.0
  %v785 = vmax.f32 %v727, 0.0
  %v786 = vmax.f32 %v732, 0.0
  %v787 = vmax.f32 %v737, 0.0
  %v788 = vmax.f32 %v742, 0.0
  %v789 = vmax.f32 %v747, 0.0
  %v790 = vmax.f32 %v752, 0.0
  %v791 = vmax.f32 %v757, 0.0
  %v792 = vld [vmem:[%s5] sm:$0xff]
  %v793 = vld [vmem:[%s5 + $0x8] sm:$0xff]
  %v794 = vld [vmem:[%s6] sm:$0x1]
  %v796 = vlaneseq
  %v797 = vshrl.u32 %v796, 7
  %v798 = vsub.s32 0, %v797
  %v799 = vrot.slane %v794, %v798
  %v802 = vsel %vm73, %v760, 0
  %v805 = vsel %vm73, %v761, 0
  %v808 = vsel %vm73, %v762, 0
  %v811 = vsel %vm73, %v763, 0
  %v814 = vsel %vm73, %v764, 0
  %v817 = vsel %vm73, %v765, 0
  %v820 = vsel %vm73, %v766, 0
  %v823 = vsel %vm73, %v767, 0
  %v826 = vsel %vm73, %v768, 0
  %v829 = vsel %vm73, %v769, 0
  %v832 = vsel %vm73, %v770, 0
  %v835 = vsel %vm73, %v771, 0
  %v838 = vsel %vm73, %v772, 0
  %v841 = vsel %vm73, %v773, 0
  %v844 = vsel %vm73, %v774, 0
  %v847 = vsel %vm73, %v775, 0
  %v850 = vsel %vm73, %v776, 0
  %v853 = vsel %vm73, %v777, 0
  %v856 = vsel %vm73, %v778, 0
  %v859 = vsel %vm73, %v779, 0
  %v862 = vsel %vm73, %v780, 0
  %v865 = vsel %vm73, %v781, 0
  %v868 = vsel %vm73, %v782, 0
  %v871 = vsel %vm73, %v783, 0
  %v874 = vsel %vm73, %v784, 0
  %v877 = vsel %vm73, %v785, 0
  %v880 = vsel %vm73, %v786, 0
  %v883 = vsel %vm73, %v787, 0
  %v886 = vsel %vm73, %v788, 0
  %v889 = vsel %vm73, %v789, 0
  %v892 = vsel %vm73, %v790, 0
  %v895 = vsel %vm73, %v791, 0
  %897 = vmatprep.subr.mxu0 0.0
  %898 = vmatpush1.msra.mxu0 %v792
  %899 = vmatprep.subr.mxu0 0.0
  %900 = vmatpush1.msra.mxu0 %v793
  %901 = vmatprep.subr.mxu0 0.0
  %902 = vmatpush1.msra.mxu0 0.0
  %903 = vmatprep.subr.mxu0 0.0
  %904 = vmatpush1.msra.mxu0 0.0
  %905 = vmatprep.subr.mxu0 0.0
  %906 = vmatpush1.msra.mxu0 0.0
  %907 = vmatprep.subr.mxu0 0.0
  %908 = vmatpush1.msra.mxu0 0.0
  %909 = vmatprep.subr.mxu0 0.0
  %910 = vmatpush1.msra.mxu0 0.0
  %911 = vmatprep.subr.mxu0 0.0
  %912 = vmatpush1.msra.mxu0 0.0
  %913 = vmatprep.subr.mxu0 0.0
  %914 = vmatpush1.msra.mxu0 0.0
  %915 = vmatprep.subr.mxu0 0.0
  %916 = vmatpush1.msra.mxu0 0.0
  %917 = vmatprep.subr.mxu0 0.0
  %918 = vmatpush1.msra.mxu0 0.0
  %919 = vmatprep.subr.mxu0 0.0
  %920 = vmatpush1.msra.mxu0 0.0
  %921 = vmatprep.subr.mxu0 0.0
  %922 = vmatpush1.msra.mxu0 0.0
  %923 = vmatprep.subr.mxu0 0.0
  %924 = vmatpush1.msra.mxu0 0.0
  %925 = vmatprep.subr.mxu0 0.0
  %926 = vmatpush1.msra.mxu0 0.0
  %927 = vmatprep.subr.mxu0 0.0
  %928 = vmatpush1.msra.mxu0 0.0
  %929 = vmatprep.subr.mxu0 0.0
  %930 = vmatpush1.msra.mxu0 0.0
  %931 = vmatprep.subr.mxu0 0.0
  %932 = vmatpush1.msra.mxu0 0.0
  %933 = vmatprep.subr.mxu0 0.0
  %934 = vmatpush1.msra.mxu0 0.0
  %935 = vmatprep.subr.mxu0 0.0
  %936 = vmatpush1.msra.mxu0 0.0
  %937 = vmatprep.subr.mxu0 0.0
  %938 = vmatpush1.msra.mxu0 0.0
  %939 = vmatprep.subr.mxu0 0.0
  %940 = vmatpush1.msra.mxu0 0.0
  %941 = vmatprep.subr.mxu0 0.0
  %942 = vmatpush1.msra.mxu0 0.0
  %943 = vmatprep.subr.mxu0 0.0
  %944 = vmatpush1.msra.mxu0 0.0
  %945 = vmatprep.subr.mxu0 0.0
  %946 = vmatpush1.msra.mxu0 0.0
  %947 = vmatprep.subr.mxu0 0.0
  %948 = vmatpush1.msra.mxu0 0.0
  %949 = vmatprep.subr.mxu0 0.0
  %950 = vmatpush1.msra.mxu0 0.0
  %951 = vmatprep.subr.mxu0 0.0
  %952 = vmatpush1.msra.mxu0 0.0
  %953 = vmatprep.subr.mxu0 0.0
  %954 = vmatpush1.msra.mxu0 0.0
  %955 = vmatprep.subr.mxu0 0.0
  %956 = vmatpush1.msra.mxu0 0.0
  %957 = vmatprep.subr.mxu0 0.0
  %958 = vmatpush1.msra.mxu0 0.0
  %959 = vmatprep.subr.mxu0 0.0
  %960 = vmatpush1.msra.mxu0 0.0
  %961 = vmatprep.mubr.f32.mxu0 0.0
  %962 = vmatmul.mubr.f32.gmra.mrb[0].mxu0 %v802
  %v963 = vpop.f32.mrb[0].mxu0
  %v964 = vadd.f32 %v799, %v963
  %v965 = vpop.f32.mrb[0].mxu0
  %966 = vmatprep.mubr.f32.mxu0 0.0
  %967 = vmatmul.mubr.f32.gmra.mrb[0].mxu0 %v805
  %v968 = vpop.f32.mrb[0].mxu0
  %v969 = vadd.f32 %v799, %v968
  %v970 = vpop.f32.mrb[0].mxu0
  %971 = vmatprep.mubr.f32.mxu0 0.0
  %972 = vmatmul.mubr.f32.gmra.mrb[0].mxu0 %v808
  %v973 = vpop.f32.mrb[0].mxu0
  %v974 = vadd.f32 %v799, %v973
  %v975 = vpop.f32.mrb[0].mxu0
  %976 = vmatprep.mubr.f32.mxu0 0.0
  %977 = vmatmul.mubr.f32.gmra.mrb[0].mxu0 %v811
  %v978 = vpop.f32.mrb[0].mxu0
  %v979 = vadd.f32 %v799, %v978
  %v980 = vpop.f32.mrb[0].mxu0
  %981 = vmatprep.mubr.f32.mxu0 0.0
  %982 = vmatmul.mubr.f32.gmra.mrb[0].mxu0 %v814
  %v983 = vpop.f32.mrb[0].mxu0
  %v984 = vadd.f32 %v799, %v983
  %v985 = vpop.f32.mrb[0].mxu0
  %986 = vmatprep.mubr.f32.mxu0 0.0
  %987 = vmatmul.mubr.f32.gmra.mrb[0].mxu0 %v817
  %v988 = vpop.f32.mrb[0].mxu0
  %v989 = vadd.f32 %v799, %v988
  %v990 = vpop.f32.mrb[0].mxu0
  %991 = vmatprep.mubr.f32.mxu0 0.0
  %992 = vmatmul.mubr.f32.gmra.mrb[0].mxu0 %v820
  %v993 = vpop.f32.mrb[0].mxu0
  %v994 = vadd.f32 %v799, %v993
  %v995 = vpop.f32.mrb[0].mxu0
  %996 = vmatprep.mubr.f32.mxu0 0.0
  %997 = vmatmul.mubr.f32.gmra.mrb[0].mxu0 %v823
  %v998 = vpop.f32.mrb[0].mxu0
  %v999 = vadd.f32 %v799, %v998
  %v1000 = vpop.f32.mrb[0].mxu0
  %1001 = vmatprep.mubr.f32.mxu0 0.0
  %1002 = vmatmul.mubr.f32.gmra.mrb[0].mxu0 %v826
  %v1003 = vpop.f32.mrb[0].mxu0
  %v1004 = vadd.f32 %v799, %v1003
  %v1005 = vpop.f32.mrb[0].mxu0
  %1006 = vmatprep.mubr.f32.mxu0 0.0
  %1007 = vmatmul.mubr.f32.gmra.mrb[0].mxu0 %v829
  %v1008 = vpop.f32.mrb[0].mxu0
  %v1009 = vadd.f32 %v799, %v1008
  %v1010 = vpop.f32.mrb[0].mxu0
  %1011 = vmatprep.mubr.f32.mxu0 0.0
  %1012 = vmatmul.mubr.f32.gmra.mrb[0].mxu0 %v832
  %v1013 = vpop.f32.mrb[0].mxu0
  %v1014 = vadd.f32 %v799, %v1013
  %v1015 = vpop.f32.mrb[0].mxu0
  %1016 = vmatprep.mubr.f32.mxu0 0.0
  %1017 = vmatmul.mubr.f32.gmra.mrb[0].mxu0 %v835
  %v1018 = vpop.f32.mrb[0].mxu0
  %v1019 = vadd.f32 %v799, %v1018
  %v1020 = vpop.f32.mrb[0].mxu0
  %1021 = vmatprep.mubr.f32.mxu0 0.0
  %1022 = vmatmul.mubr.f32.gmra.mrb[0].mxu0 %v838
  %v1023 = vpop.f32.mrb[0].mxu0
  %v1024 = vadd.f32 %v799, %v1023
  %v1025 = vpop.f32.mrb[0].mxu0
  %1026 = vmatprep.mubr.f32.mxu0 0.0
  %1027 = vmatmul.mubr.f32.gmra.mrb[0].mxu0 %v841
  %v1028 = vpop.f32.mrb[0].mxu0
  %v1029 = vadd.f32 %v799, %v1028
  %v1030 = vpop.f32.mrb[0].mxu0
  %1031 = vmatprep.mubr.f32.mxu0 0.0
  %1032 = vmatmul.mubr.f32.gmra.mrb[0].mxu0 %v844
  %v1033 = vpop.f32.mrb[0].mxu0
  %v1034 = vadd.f32 %v799, %v1033
  %v1035 = vpop.f32.mrb[0].mxu0
  %1036 = vmatprep.mubr.f32.mxu0 0.0
  %1037 = vmatmul.mubr.f32.gmra.mrb[0].mxu0 %v847
  %v1038 = vpop.f32.mrb[0].mxu0
  %v1039 = vadd.f32 %v799, %v1038
  %v1040 = vpop.f32.mrb[0].mxu0
  %1041 = vmatprep.mubr.f32.mxu0 0.0
  %1042 = vmatmul.mubr.f32.gmra.mrb[0].mxu0 %v850
  %v1043 = vpop.f32.mrb[0].mxu0
  %v1044 = vadd.f32 %v799, %v1043
  %v1045 = vpop.f32.mrb[0].mxu0
  %1046 = vmatprep.mubr.f32.mxu0 0.0
  %1047 = vmatmul.mubr.f32.gmra.mrb[0].mxu0 %v853
  %v1048 = vpop.f32.mrb[0].mxu0
  %v1049 = vadd.f32 %v799, %v1048
  %v1050 = vpop.f32.mrb[0].mxu0
  %1051 = vmatprep.mubr.f32.mxu0 0.0
  %1052 = vmatmul.mubr.f32.gmra.mrb[0].mxu0 %v856
  %v1053 = vpop.f32.mrb[0].mxu0
  %v1054 = vadd.f32 %v799, %v1053
  %v1055 = vpop.f32.mrb[0].mxu0
  %1056 = vmatprep.mubr.f32.mxu0 0.0
  %1057 = vmatmul.mubr.f32.gmra.mrb[0].mxu0 %v859
  %v1058 = vpop.f32.mrb[0].mxu0
  %v1059 = vadd.f32 %v799, %v1058
  %v1060 = vpop.f32.mrb[0].mxu0
  %1061 = vmatprep.mubr.f32.mxu0 0.0
  %1062 = vmatmul.mubr.f32.gmra.mrb[0].mxu0 %v862
  %v1063 = vpop.f32.mrb[0].mxu0
  %v1064 = vadd.f32 %v799, %v1063
  %v1065 = vpop.f32.mrb[0].mxu0
  %1066 = vmatprep.mubr.f32.mxu0 0.0
  %1067 = vmatmul.mubr.f32.gmra.mrb[0].mxu0 %v865
  %v1068 = vpop.f32.mrb[0].mxu0
  %v1069 = vadd.f32 %v799, %v1068
  %v1070 = vpop.f32.mrb[0].mxu0
  %1071 = vmatprep.mubr.f32.mxu0 0.0
  %1072 = vmatmul.mubr.f32.gmra.mrb[0].mxu0 %v868
  %v1073 = vpop.f32.mrb[0].mxu0
  %v1074 = vadd.f32 %v799, %v1073
  %v1075 = vpop.f32.mrb[0].mxu0
  %1076 = vmatprep.mubr.f32.mxu0 0.0
  %1077 = vmatmul.mubr.f32.gmra.mrb[0].mxu0 %v871
  %v1078 = vpop.f32.mrb[0].mxu0
  %v1079 = vadd.f32 %v799, %v1078
  %v1080 = vpop.f32.mrb[0].mxu0
  %1081 = vmatprep.mubr.f32.mxu0 0.0
  %1082 = vmatmul.mubr.f32.gmra.mrb[0].mxu0 %v874
  %v1083 = vpop.f32.mrb[0].mxu0
  %v1084 = vadd.f32 %v799, %v1083
  %v1085 = vpop.f32.mrb[0].mxu0
  %1086 = vmatprep.mubr.f32.mxu0 0.0
  %1087 = vmatmul.mubr.f32.gmra.mrb[0].mxu0 %v877
  %v1088 = vpop.f32.mrb[0].mxu0
  %v1089 = vadd.f32 %v799, %v1088
  %v1090 = vpop.f32.mrb[0].mxu0
  %1091 = vmatprep.mubr.f32.mxu0 0.0
  %1092 = vmatmul.mubr.f32.gmra.mrb[0].mxu0 %v880
  %v1093 = vpop.f32.mrb[0].mxu0
  %v1094 = vadd.f32 %v799, %v1093
  %v1095 = vpop.f32.mrb[0].mxu0
  %1096 = vmatprep.mubr.f32.mxu0 0.0
  %1097 = vmatmul.mubr.f32.gmra.mrb[0].mxu0 %v883
  %v1098 = vpop.f32.mrb[0].mxu0
  %v1099 = vadd.f32 %v799, %v1098
  %v1100 = vpop.f32.mrb[0].mxu0
  %1101 = vmatprep.mubr.f32.mxu0 0.0
  %1102 = vmatmul.mubr.f32.gmra.mrb[0].mxu0 %v886
  %v1103 = vpop.f32.mrb[0].mxu0
  %v1104 = vadd.f32 %v799, %v1103
  %v1105 = vpop.f32.mrb[0].mxu0
  %1106 = vmatprep.mubr.f32.mxu0 0.0
  %1107 = vmatmul.mubr.f32.gmra.mrb[0].mxu0 %v889
  %v1108 = vpop.f32.mrb[0].mxu0
  %v1109 = vadd.f32 %v799, %v1108
  %v1110 = vpop.f32.mrb[0].mxu0
  %1111 = vmatprep.mubr.f32.mxu0 0.0
  %1112 = vmatmul.mubr.f32.gmra.mrb[0].mxu0 %v892
  %v1113 = vpop.f32.mrb[0].mxu0
  %v1114 = vadd.f32 %v799, %v1113
  %v1115 = vpop.f32.mrb[0].mxu0
  %1116 = vmatprep.mubr.f32.mxu0 0.0
  %1117 = vmatmul.mubr.f32.gmra.mrb[0].mxu0 %v895
  %v1118 = vpop.f32.mrb[0].mxu0
  %v1119 = vadd.f32 %v799, %v1118
  %v1120 = vpop.f32.mrb[0].mxu0
  %1121 = vdwg.mxu0
  %v1122 = vmax.f32 %v964, 0.0
  %v1123 = vmax.f32 %v969, 0.0
  %v1124 = vmax.f32 %v974, 0.0
  %v1125 = vmax.f32 %v979, 0.0
  %v1126 = vmax.f32 %v984, 0.0
  %v1127 = vmax.f32 %v989, 0.0
  %v1128 = vmax.f32 %v994, 0.0
  %v1129 = vmax.f32 %v999, 0.0
  %v1130 = vmax.f32 %v1004, 0.0
  %v1131 = vmax.f32 %v1009, 0.0
  %v1132 = vmax.f32 %v1014, 0.0
  %v1133 = vmax.f32 %v1019, 0.0
  %v1134 = vmax.f32 %v1024, 0.0
  %v1135 = vmax.f32 %v1029, 0.0
  %v1136 = vmax.f32 %v1034, 0.0
  %v1137 = vmax.f32 %v1039, 0.0
  %v1138 = vmax.f32 %v1044, 0.0
  %v1139 = vmax.f32 %v1049, 0.0
  %v1140 = vmax.f32 %v1054, 0.0
  %v1141 = vmax.f32 %v1059, 0.0
  %v1142 = vmax.f32 %v1064, 0.0
  %v1143 = vmax.f32 %v1069, 0.0
  %v1144 = vmax.f32 %v1074, 0.0
  %v1145 = vmax.f32 %v1079, 0.0
  %v1146 = vmax.f32 %v1084, 0.0
  %v1147 = vmax.f32 %v1089, 0.0
  %v1148 = vmax.f32 %v1094, 0.0
  %v1149 = vmax.f32 %v1099, 0.0
  %v1150 = vmax.f32 %v1104, 0.0
  %v1151 = vmax.f32 %v1109, 0.0
  %v1152 = vmax.f32 %v1114, 0.0
  %v1153 = vmax.f32 %v1119, 0.0
  %v1154 = vld [vmem:[%s7] sm:$0xff]
  %v1155 = vld [vmem:[%s8] sm:$0x1]
  %v1157 = vlaneseq
  %v1158 = vshrl.u32 %v1157, 7
  %v1159 = vsub.s32 0, %v1158
  %v1160 = vrot.slane %v1155, %v1159
  %vm1162 = vcmask 64512
  %v1164 = vsel %vm1162, %v1122, 0
  %v1167 = vsel %vm1162, %v1123, 0
  %v1170 = vsel %vm1162, %v1124, 0
  %v1173 = vsel %vm1162, %v1125, 0
  %v1176 = vsel %vm1162, %v1126, 0
  %v1179 = vsel %vm1162, %v1127, 0
  %v1182 = vsel %vm1162, %v1128, 0
  %v1185 = vsel %vm1162, %v1129, 0
  %v1188 = vsel %vm1162, %v1130, 0
  %v1191 = vsel %vm1162, %v1131, 0
  %v1194 = vsel %vm1162, %v1132, 0
  %v1197 = vsel %vm1162, %v1133, 0
  %v1200 = vsel %vm1162, %v1134, 0
  %v1203 = vsel %vm1162, %v1135, 0
  %v1206 = vsel %vm1162, %v1136, 0
  %v1209 = vsel %vm1162, %v1137, 0
  %v1212 = vsel %vm1162, %v1138, 0
  %v1215 = vsel %vm1162, %v1139, 0
  %v1218 = vsel %vm1162, %v1140, 0
  %v1221 = vsel %vm1162, %v1141, 0
  %v1224 = vsel %vm1162, %v1142, 0
  %v1227 = vsel %vm1162, %v1143, 0
  %v1230 = vsel %vm1162, %v1144, 0
  %v1233 = vsel %vm1162, %v1145, 0
  %v1236 = vsel %vm1162, %v1146, 0
  %v1239 = vsel %vm1162, %v1147, 0
  %v1242 = vsel %vm1162, %v1148, 0
  %v1245 = vsel %vm1162, %v1149, 0
  %v1248 = vsel %vm1162, %v1150, 0
  %v1251 = vsel %vm1162, %v1151, 0
  %v1254 = vsel %vm1162, %v1152, 0
  %v1257 = vsel %vm1162, %v1153, 0
  %1259 = vmatprep.subr.mxu0 0.0
  %1260 = vmatpush1.msra.mxu0 %v1154
  %1261 = vmatprep.subr.mxu0 0.0
  %1262 = vmatpush1.msra.mxu0 0.0
  %1263 = vmatprep.subr.mxu0 0.0
  %1264 = vmatpush1.msra.mxu0 0.0
  %1265 = vmatprep.subr.mxu0 0.0
  %1266 = vmatpush1.msra.mxu0 0.0
  %1267 = vmatprep.subr.mxu0 0.0
  %1268 = vmatpush1.msra.mxu0 0.0
  %1269 = vmatprep.subr.mxu0 0.0
  %1270 = vmatpush1.msra.mxu0 0.0
  %1271 = vmatprep.subr.mxu0 0.0
  %1272 = vmatpush1.msra.mxu0 0.0
  %1273 = vmatprep.subr.mxu0 0.0
  %1274 = vmatpush1.msra.mxu0 0.0
  %1275 = vmatprep.subr.mxu0 0.0
  %1276 = vmatpush1.msra.mxu0 0.0
  %1277 = vmatprep.subr.mxu0 0.0
  %1278 = vmatpush1.msra.mxu0 0.0
  %1279 = vmatprep.subr.mxu0 0.0
  %1280 = vmatpush1.msra.mxu0 0.0
  %1281 = vmatprep.subr.mxu0 0.0
  %1282 = vmatpush1.msra.mxu0 0.0
  %1283 = vmatprep.subr.mxu0 0.0
  %1284 = vmatpush1.msra.mxu0 0.0
  %1285 = vmatprep.subr.mxu0 0.0
  %1286 = vmatpush1.msra.mxu0 0.0
  %1287 = vmatprep.subr.mxu0 0.0
  %1288 = vmatpush1.msra.mxu0 0.0
  %1289 = vmatprep.subr.mxu0 0.0
  %1290 = vmatpush1.msra.mxu0 0.0
  %1291 = vmatprep.subr.mxu0 0.0
  %1292 = vmatpush1.msra.mxu0 0.0
  %1293 = vmatprep.subr.mxu0 0.0
  %1294 = vmatpush1.msra.mxu0 0.0
  %1295 = vmatprep.subr.mxu0 0.0
  %1296 = vmatpush1.msra.mxu0 0.0
  %1297 = vmatprep.subr.mxu0 0.0
  %1298 = vmatpush1.msra.mxu0 0.0
  %1299 = vmatprep.subr.mxu0 0.0
  %1300 = vmatpush1.msra.mxu0 0.0
  %1301 = vmatprep.subr.mxu0 0.0
  %1302 = vmatpush1.msra.mxu0 0.0
  %1303 = vmatprep.subr.mxu0 0.0
  %1304 = vmatpush1.msra.mxu0 0.0
  %1305 = vmatprep.subr.mxu0 0.0
  %1306 = vmatpush1.msra.mxu0 0.0
  %1307 = vmatprep.subr.mxu0 0.0
  %1308 = vmatpush1.msra.mxu0 0.0
  %1309 = vmatprep.subr.mxu0 0.0
  %1310 = vmatpush1.msra.mxu0 0.0
  %1311 = vmatprep.subr.mxu0 0.0
  %1312 = vmatpush1.msra.mxu0 0.0
  %1313 = vmatprep.subr.mxu0 0.0
  %1314 = vmatpush1.msra.mxu0 0.0
  %1315 = vmatprep.subr.mxu0 0.0
  %1316 = vmatpush1.msra.mxu0 0.0
  %1317 = vmatprep.subr.mxu0 0.0
  %1318 = vmatpush1.msra.mxu0 0.0
  %1319 = vmatprep.subr.mxu0 0.0
  %1320 = vmatpush1.msra.mxu0 0.0
  %1321 = vmatprep.subr.mxu0 0.0
  %1322 = vmatpush1.msra.mxu0 0.0
  %1323 = vmatprep.mubr.f32.mxu0 0.0
  %1324 = vmatmul.mubr.f32.gmra.mrb[0].mxu0 %v1164
  %v1325 = vpop.f32.mrb[0].mxu0
  %v1326 = vadd.f32 %v1160, %v1325
  %v1327 = vpop.f32.mrb[0].mxu0
  %1328 = vmatprep.mubr.f32.mxu0 0.0
  %1329 = vmatmul.mubr.f32.gmra.mrb[0].mxu0 %v1167
  %v1330 = vpop.f32.mrb[0].mxu0
  %v1331 = vadd.f32 %v1160, %v1330
  %v1332 = vpop.f32.mrb[0].mxu0
  %1333 = vmatprep.mubr.f32.mxu0 0.0
  %1334 = vmatmul.mubr.f32.gmra.mrb[0].mxu0 %v1170
  %v1335 = vpop.f32.mrb[0].mxu0
  %v1336 = vadd.f32 %v1160, %v1335
  %v1337 = vpop.f32.mrb[0].mxu0
  %1338 = vmatprep.mubr.f32.mxu0 0.0
  %1339 = vmatmul.mubr.f32.gmra.mrb[0].mxu0 %v1173
  %v1340 = vpop.f32.mrb[0].mxu0
  %v1341 = vadd.f32 %v1160, %v1340
  %v1342 = vpop.f32.mrb[0].mxu0
  %1343 = vmatprep.mubr.f32.mxu0 0.0
  %1344 = vmatmul.mubr.f32.gmra.mrb[0].mxu0 %v1176
  %v1345 = vpop.f32.mrb[0].mxu0
  %v1346 = vadd.f32 %v1160, %v1345
  %v1347 = vpop.f32.mrb[0].mxu0
  %1348 = vmatprep.mubr.f32.mxu0 0.0
  %1349 = vmatmul.mubr.f32.gmra.mrb[0].mxu0 %v1179
  %v1350 = vpop.f32.mrb[0].mxu0
  %v1351 = vadd.f32 %v1160, %v1350
  %v1352 = vpop.f32.mrb[0].mxu0
  %1353 = vmatprep.mubr.f32.mxu0 0.0
  %1354 = vmatmul.mubr.f32.gmra.mrb[0].mxu0 %v1182
  %v1355 = vpop.f32.mrb[0].mxu0
  %v1356 = vadd.f32 %v1160, %v1355
  %v1357 = vpop.f32.mrb[0].mxu0
  %1358 = vmatprep.mubr.f32.mxu0 0.0
  %1359 = vmatmul.mubr.f32.gmra.mrb[0].mxu0 %v1185
  %v1360 = vpop.f32.mrb[0].mxu0
  %v1361 = vadd.f32 %v1160, %v1360
  %v1362 = vpop.f32.mrb[0].mxu0
  %1363 = vmatprep.mubr.f32.mxu0 0.0
  %1364 = vmatmul.mubr.f32.gmra.mrb[0].mxu0 %v1188
  %v1365 = vpop.f32.mrb[0].mxu0
  %v1366 = vadd.f32 %v1160, %v1365
  %v1367 = vpop.f32.mrb[0].mxu0
  %1368 = vmatprep.mubr.f32.mxu0 0.0
  %1369 = vmatmul.mubr.f32.gmra.mrb[0].mxu0 %v1191
  %v1370 = vpop.f32.mrb[0].mxu0
  %v1371 = vadd.f32 %v1160, %v1370
  %v1372 = vpop.f32.mrb[0].mxu0
  %1373 = vmatprep.mubr.f32.mxu0 0.0
  %1374 = vmatmul.mubr.f32.gmra.mrb[0].mxu0 %v1194
  %v1375 = vpop.f32.mrb[0].mxu0
  %v1376 = vadd.f32 %v1160, %v1375
  %v1377 = vpop.f32.mrb[0].mxu0
  %1378 = vmatprep.mubr.f32.mxu0 0.0
  %1379 = vmatmul.mubr.f32.gmra.mrb[0].mxu0 %v1197
  %v1380 = vpop.f32.mrb[0].mxu0
  %v1381 = vadd.f32 %v1160, %v1380
  %v1382 = vpop.f32.mrb[0].mxu0
  %1383 = vmatprep.mubr.f32.mxu0 0.0
  %1384 = vmatmul.mubr.f32.gmra.mrb[0].mxu0 %v1200
  %v1385 = vpop.f32.mrb[0].mxu0
  %v1386 = vadd.f32 %v1160, %v1385
  %v1387 = vpop.f32.mrb[0].mxu0
  %1388 = vmatprep.mubr.f32.mxu0 0.0
  %1389 = vmatmul.mubr.f32.gmra.mrb[0].mxu0 %v1203
  %v1390 = vpop.f32.mrb[0].mxu0
  %v1391 = vadd.f32 %v1160, %v1390
  %v1392 = vpop.f32.mrb[0].mxu0
  %1393 = vmatprep.mubr.f32.mxu0 0.0
  %1394 = vmatmul.mubr.f32.gmra.mrb[0].mxu0 %v1206
  %v1395 = vpop.f32.mrb[0].mxu0
  %v1396 = vadd.f32 %v1160, %v1395
  %v1397 = vpop.f32.mrb[0].mxu0
  %1398 = vmatprep.mubr.f32.mxu0 0.0
  %1399 = vmatmul.mubr.f32.gmra.mrb[0].mxu0 %v1209
  %v1400 = vpop.f32.mrb[0].mxu0
  %v1401 = vadd.f32 %v1160, %v1400
  %v1402 = vpop.f32.mrb[0].mxu0
  %1403 = vmatprep.mubr.f32.mxu0 0.0
  %1404 = vmatmul.mubr.f32.gmra.mrb[0].mxu0 %v1212
  %v1405 = vpop.f32.mrb[0].mxu0
  %v1406 = vadd.f32 %v1160, %v1405
  %v1407 = vpop.f32.mrb[0].mxu0
  %1408 = vmatprep.mubr.f32.mxu0 0.0
  %1409 = vmatmul.mubr.f32.gmra.mrb[0].mxu0 %v1215
  %v1410 = vpop.f32.mrb[0].mxu0
  %v1411 = vadd.f32 %v1160, %v1410
  %v1412 = vpop.f32.mrb[0].mxu0
  %1413 = vmatprep.mubr.f32.mxu0 0.0
  %1414 = vmatmul.mubr.f32.gmra.mrb[0].mxu0 %v1218
  %v1415 = vpop.f32.mrb[0].mxu0
  %v1416 = vadd.f32 %v1160, %v1415
  %v1417 = vpop.f32.mrb[0].mxu0
  %1418 = vmatprep.mubr.f32.mxu0 0.0
  %1419 = vmatmul.mubr.f32.gmra.mrb[0].mxu0 %v1221
  %v1420 = vpop.f32.mrb[0].mxu0
  %v1421 = vadd.f32 %v1160, %v1420
  %v1422 = vpop.f32.mrb[0].mxu0
  %1423 = vmatprep.mubr.f32.mxu0 0.0
  %1424 = vmatmul.mubr.f32.gmra.mrb[0].mxu0 %v1224
  %v1425 = vpop.f32.mrb[0].mxu0
  %v1426 = vadd.f32 %v1160, %v1425
  %v1427 = vpop.f32.mrb[0].mxu0
  %1428 = vmatprep.mubr.f32.mxu0 0.0
  %1429 = vmatmul.mubr.f32.gmra.mrb[0].mxu0 %v1227
  %v1430 = vpop.f32.mrb[0].mxu0
  %v1431 = vadd.f32 %v1160, %v1430
  %v1432 = vpop.f32.mrb[0].mxu0
  %1433 = vmatprep.mubr.f32.mxu0 0.0
  %1434 = vmatmul.mubr.f32.gmra.mrb[0].mxu0 %v1230
  %v1435 = vpop.f32.mrb[0].mxu0
  %v1436 = vadd.f32 %v1160, %v1435
  %v1437 = vpop.f32.mrb[0].mxu0
  %1438 = vmatprep.mubr.f32.mxu0 0.0
  %1439 = vmatmul.mubr.f32.gmra.mrb[0].mxu0 %v1233
  %v1440 = vpop.f32.mrb[0].mxu0
  %v1441 = vadd.f32 %v1160, %v1440
  %v1442 = vpop.f32.mrb[0].mxu0
  %1443 = vmatprep.mubr.f32.mxu0 0.0
  %1444 = vmatmul.mubr.f32.gmra.mrb[0].mxu0 %v1236
  %v1445 = vpop.f32.mrb[0].mxu0
  %v1446 = vadd.f32 %v1160, %v1445
  %v1447 = vpop.f32.mrb[0].mxu0
  %1448 = vmatprep.mubr.f32.mxu0 0.0
  %1449 = vmatmul.mubr.f32.gmra.mrb[0].mxu0 %v1239
  %v1450 = vpop.f32.mrb[0].mxu0
  %v1451 = vadd.f32 %v1160, %v1450
  %v1452 = vpop.f32.mrb[0].mxu0
  %1453 = vmatprep.mubr.f32.mxu0 0.0
  %1454 = vmatmul.mubr.f32.gmra.mrb[0].mxu0 %v1242
  %v1455 = vpop.f32.mrb[0].mxu0
  %v1456 = vadd.f32 %v1160, %v1455
  %v1457 = vpop.f32.mrb[0].mxu0
  %1458 = vmatprep.mubr.f32.mxu0 0.0
  %1459 = vmatmul.mubr.f32.gmra.mrb[0].mxu0 %v1245
  %v1460 = vpop.f32.mrb[0].mxu0
  %v1461 = vadd.f32 %v1160, %v1460
  %v1462 = vpop.f32.mrb[0].mxu0
  %1463 = vmatprep.mubr.f32.mxu0 0.0
  %1464 = vmatmul.mubr.f32.gmra.mrb[0].mxu0 %v1248
  %v1465 = vpop.f32.mrb[0].mxu0
  %v1466 = vadd.f32 %v1160, %v1465
  %v1467 = vpop.f32.mrb[0].mxu0
  %1468 = vmatprep.mubr.f32.mxu0 0.0
  %1469 = vmatmul.mubr.f32.gmra.mrb[0].mxu0 %v1251
  %v1470 = vpop.f32.mrb[0].mxu0
  %v1471 = vadd.f32 %v1160, %v1470
  %v1472 = vpop.f32.mrb[0].mxu0
  %1473 = vmatprep.mubr.f32.mxu0 0.0
  %1474 = vmatmul.mubr.f32.gmra.mrb[0].mxu0 %v1254
  %v1475 = vpop.f32.mrb[0].mxu0
  %v1476 = vadd.f32 %v1160, %v1475
  %v1477 = vpop.f32.mrb[0].mxu0
  %1478 = vmatprep.mubr.f32.mxu0 0.0
  %1479 = vmatmul.mubr.f32.gmra.mrb[0].mxu0 %v1257
  %v1480 = vpop.f32.mrb[0].mxu0
  %v1481 = vadd.f32 %v1160, %v1480
  %v1482 = vpop.f32.mrb[0].mxu0
  %1483 = vdwg.mxu0
  %vm1484 = vcmask 31744
  %1485 = vst.msk [vmem:[%s9] sm:$0xff] %vm1484, %v1326
  %1486 = vst.msk [vmem:[%s9 + $0x8] sm:$0xff] %vm1484, %v1331
  %1487 = vst.msk [vmem:[%s9 + $0x10] sm:$0xff] %vm1484, %v1336
  %1488 = vst.msk [vmem:[%s9 + $0x18] sm:$0xff] %vm1484, %v1341
  %1489 = vst.msk [vmem:[%s9 + $0x20] sm:$0xff] %vm1484, %v1346
  %1490 = vst.msk [vmem:[%s9 + $0x28] sm:$0xff] %vm1484, %v1351
  %1491 = vst.msk [vmem:[%s9 + $0x30] sm:$0xff] %vm1484, %v1356
  %1492 = vst.msk [vmem:[%s9 + $0x38] sm:$0xff] %vm1484, %v1361
  %1493 = vst.msk [vmem:[%s9 + $0x40] sm:$0xff] %vm1484, %v1366
  %1494 = vst.msk [vmem:[%s9 + $0x48] sm:$0xff] %vm1484, %v1371
  %1495 = vst.msk [vmem:[%s9 + $0x50] sm:$0xff] %vm1484, %v1376
  %1496 = vst.msk [vmem:[%s9 + $0x58] sm:$0xff] %vm1484, %v1381
  %1497 = vst.msk [vmem:[%s9 + $0x60] sm:$0xff] %vm1484, %v1386
  %1498 = vst.msk [vmem:[%s9 + $0x68] sm:$0xff] %vm1484, %v1391
  %1499 = vst.msk [vmem:[%s9 + $0x70] sm:$0xff] %vm1484, %v1396
  %1500 = vst.msk [vmem:[%s9 + $0x78] sm:$0xff] %vm1484, %v1401
  %1501 = vst.msk [vmem:[%s9 + $0x80] sm:$0xff] %vm1484, %v1406
  %1502 = vst.msk [vmem:[%s9 + $0x88] sm:$0xff] %vm1484, %v1411
  %1503 = vst.msk [vmem:[%s9 + $0x90] sm:$0xff] %vm1484, %v1416
  %1504 = vst.msk [vmem:[%s9 + $0x98] sm:$0xff] %vm1484, %v1421
  %1505 = vst.msk [vmem:[%s9 + $0xa0] sm:$0xff] %vm1484, %v1426
  %1506 = vst.msk [vmem:[%s9 + $0xa8] sm:$0xff] %vm1484, %v1431
  %1507 = vst.msk [vmem:[%s9 + $0xb0] sm:$0xff] %vm1484, %v1436
  %1508 = vst.msk [vmem:[%s9 + $0xb8] sm:$0xff] %vm1484, %v1441
  %1509 = vst.msk [vmem:[%s9 + $0xc0] sm:$0xff] %vm1484, %v1446
  %1510 = vst.msk [vmem:[%s9 + $0xc8] sm:$0xff] %vm1484, %v1451
  %1511 = vst.msk [vmem:[%s9 + $0xd0] sm:$0xff] %vm1484, %v1456
  %1512 = vst.msk [vmem:[%s9 + $0xd8] sm:$0xff] %vm1484, %v1461
  %1513 = vst.msk [vmem:[%s9 + $0xe0] sm:$0xff] %vm1484, %v1466
  %1514 = vst.msk [vmem:[%s9 + $0xe8] sm:$0xff] %vm1484, %v1471
  %1515 = vst.msk [vmem:[%s9 + $0xf0] sm:$0xff] %vm1484, %v1476
  %1516 = vst.msk [vmem:[%s9 + $0xf8] sm:$0xff] %vm1484, %v1481
  // Predicated region
  $region38: #{tpu_custom_call.1} parent=0 // pred_check
    _
  $region39: #{tpu_custom_call.1} parent=0 // pred_check_branch
    %1518 = sbr.rel (0) target = $region41
  $region40: #{tpu_custom_call.1} parent=0 // pred_region
    _
  $region41: #{tpu_custom_call.1} parent=0 // pred_fallthru
    _
  // Predicated region
  $region42: #{tpu_custom_call.1} parent=0 // pred_check
    _
  $region43: #{tpu_custom_call.1} parent=0 // pred_check_branch
    %1520 = sbr.rel (0) target = $region45
  $region44: #{tpu_custom_call.1} parent=0 // pred_region
    _
  $region45: #{tpu_custom_call.1} parent=0 // pred_fallthru
    _

</llo_original>
